<compile_context>
chip_gen: v6e
topology: v6e:2x2x1
jax: 0.10.0
libtpu: 0.0.40
codegen_flags: <defaults>
</compile_context>

<pallas_src>
import functools

import jax
import jax.numpy as jnp
from jax.experimental import pallas as pl
from jax.experimental.pallas import tpu as pltpu


def _round_up(x, m):
    return ((x + m - 1) // m) * m


# ---------------------------------------------------------------------------
# Pallas kernel: sequential LSTM recurrence over a chunk of timesteps.
# ---------------------------------------------------------------------------
def _lstm_chunk_kernel(gx_ref, whh_ref, hids_ref, hn_ref, cn_ref, h_sc, c_sc):
    """One grid step == one chunk of CT timesteps.

    gx_ref  : (CT, Bp, 4*Hp)  precomputed input gates (x @ W_ih^T + bias)
    whh_ref : (Hp, 4*Hp)      hidden->gates weight (pre-transposed, resident)
    hids_ref: (CT, Bp, Hp)    hidden states for this chunk
    hn_ref  : (Bp, Hp)        final hidden state (written on last chunk only)
    cn_ref  : (Bp, Hp)        final cell state   (written on last chunk only)
    h_sc/c_sc: (Bp, Hp)       VMEM carries across chunks
    """
    chunk = pl.program_id(0)

    @pl.when(chunk == 0)
    def _init():
        h_sc[...] = jnp.zeros_like(h_sc)
        c_sc[...] = jnp.zeros_like(c_sc)

    ct, _, gdim = gx_ref.shape
    hp = gdim // 4
    whh = whh_ref[...]  # hoisted: stays resident for the whole chunk loop

    def step(t, carry):
        h = h_sc[...]
        c_prev = c_sc[...]
        # Only ONE matmul on the serial critical path (the x-projection was
        # precomputed outside the recurrence).
        gates = gx_ref[t] + jnp.dot(h, whh, preferred_element_type=jnp.float32)

        # PyTorch nn.LSTM gate order: input, forget, cell(g), output.
        # With Hp a multiple of 128 each slice is a full-lane tile (unmasked).
        i_g = jax.nn.sigmoid(gates[:, 0 * hp:1 * hp])
        f_g = jax.nn.sigmoid(gates[:, 1 * hp:2 * hp])
        g_g = jnp.tanh(gates[:, 2 * hp:3 * hp])
        o_g = jax.nn.sigmoid(gates[:, 3 * hp:4 * hp])

        c_new = f_g * c_prev + i_g * g_g
        h_new = o_g * jnp.tanh(c_new)

        h_sc[...] = h_new
        c_sc[...] = c_new
        hids_ref[t] = h_new
        return carry

    jax.lax.fori_loop(0, ct, step, 0, unroll=(True if ct <= 16 else 8))

    # Write h_n / c_n once, at the very end (no per-step redundant stores).
    @pl.when(chunk == pl.num_programs(0) - 1)
    def _finalize():
        hn_ref[...] = h_sc[...]
        cn_ref[...] = c_sc[...]


def _lstm_recurrence(gates_x, w_hh_pad):
    """gates_x: (T, Bp, 4*Hp) f32, w_hh_pad: (Hp, 4*Hp) f32.

    Returns hids (T, Bp, Hp), h_n (Bp, Hp), c_n (Bp, Hp).
    """
    T, Bp, G = gates_x.shape
    Hp = w_hh_pad.shape[0]
    assert G == 4 * Hp

    # Chunk the time axis: BlockSpec pipelining prefetches the next gates_x
    # chunk (HBM->VMEM) while the in-kernel fori_loop recurs over this chunk.
    if T <= 64:
        ct = T
    else:
        ct = next((c for c in range(64, 0, -1) if T % c == 0), T)
    n_chunks = T // ct

    return pl.pallas_call(
        _lstm_chunk_kernel,
        out_shape=(
            jax.ShapeDtypeStruct((T, Bp, Hp), jnp.float32),
            jax.ShapeDtypeStruct((Bp, Hp), jnp.float32),
            jax.ShapeDtypeStruct((Bp, Hp), jnp.float32),
        ),
        grid_spec=pltpu.PrefetchScalarGridSpec(
            num_scalar_prefetch=0,
            grid=(n_chunks,),
            in_specs=[
                pl.BlockSpec((ct, Bp, G), lambda c: (c, 0, 0)),   # gates_x chunk
                pl.BlockSpec((Hp, G), lambda c: (0, 0)),          # W_hh^T (resident)
            ],
            out_specs=[
                pl.BlockSpec((ct, Bp, Hp), lambda c: (c, 0, 0)),  # hids chunk
                pl.BlockSpec((Bp, Hp), lambda c: (0, 0)),         # h_n
                pl.BlockSpec((Bp, Hp), lambda c: (0, 0)),         # c_n
            ],
            scratch_shapes=[
                pltpu.VMEM((Bp, Hp), jnp.float32),                # h carry
                pltpu.VMEM((Bp, Hp), jnp.float32),                # c carry
            ],
        ),
        compiler_params=pltpu.CompilerParams(
            # strictly sequential recurrence; c_n/h_n revisit pattern requires it
            dimension_semantics=("arbitrary",),
            # NOTE: at large H/E, switch W to bf16 and set vmem_limit_bytes here.
        ),
    )(gates_x, w_hh_pad)


# ---------------------------------------------------------------------------
# Full forward (embedding gather + batched input projection in XLA, recurrence
# in Pallas), jitted end to end.
# ---------------------------------------------------------------------------
@functools.partial(jax.jit, static_argnames=("hidden_size",))
def seq_encoder2_forward(tokens, embedding, w_ih_pad, w_hh_pad, bias_pad, *,
                         hidden_size):
    B, T = tokens.shape
    Bp = _round_up(B, 8)                         # sublane-pad the batch

    tokens_tb = jnp.transpose(tokens)            # cheap int (B,T)->(T,B)
    if Bp != B:
        tokens_tb = jnp.pad(tokens_tb, ((0, 0), (0, Bp - B)))  # pad with token 0

    x_emb = jnp.take(embedding, tokens_tb, axis=0)             # (T, Bp, E)

    # Batched input projection for ALL timesteps at once (M = T*Bp), hoisted
    # off the sequential critical path.
    gates_x = jnp.einsum("tbe,ef->tbf", x_emb, w_ih_pad,
                         preferred_element_type=jnp.float32) + bias_pad

    hids_p, hn_p, cn_p = _lstm_recurrence(gates_x, w_hh_pad)

    H = hidden_size
    hids = jnp.transpose(hids_p[:, :B, :H], (1, 0, 2))          # (B, T, H)
    h_n = hn_p[:B, :H]
    c_n = cn_p[:B, :H]
    return hids, (h_n, c_n)


class SeqEncoder2Pallas:
    """JAX/Pallas port of the PyTorch SeqEncoder2 module (n_layers=1)."""

    def __init__(self, vocab_size, emb_size, hidden_size, key):
        self.emb_size = emb_size
        self.hidden_size = hidden_size

        k_emb, k_ih, k_hh, k_bih, k_bhh = jax.random.split(key, 5)

        # Embedding: xavier_uniform_ with gain=1, padding_idx=0 row zeroed.
        bound = jnp.sqrt(6.0 / (vocab_size + emb_size))
        emb = jax.random.uniform(
            k_emb, (vocab_size, emb_size), jnp.float32, -bound, bound)
        self.embedding = emb.at[0].set(0.0)

        # LSTM params, PyTorch default init: U(-1/sqrt(H), 1/sqrt(H)).
        H, E = hidden_size, emb_size
        s = 1.0 / jnp.sqrt(jnp.float32(H))
        w_ih = jax.random.uniform(k_ih, (4 * H, E), jnp.float32, -s, s)
        w_hh = jax.random.uniform(k_hh, (4 * H, H), jnp.float32, -s, s)
        b_ih = jax.random.uniform(k_bih, (4 * H,), jnp.float32, -s, s)
        b_hh = jax.random.uniform(k_bhh, (4 * H,), jnp.float32, -s, s)
        self.w_ih, self.w_hh, self.b_ih, self.b_hh = w_ih, w_hh, b_ih, b_hh

        # Lane-dense padded layout: H -> Hp (multiple of 128).  Each gate's H
        # real columns sit at the start of a 128-aligned Hp block; remaining
        # rows/cols are zero, so padded lanes compute exactly 0 for h
        # (sigmoid(0) * tanh(0) chain) and never mix into real lanes.
        Hp = _round_up(H, 128)
        self.hp = Hp
        w_ih_pad = jnp.zeros((E, 4 * Hp), jnp.float32)
        w_hh_pad = jnp.zeros((Hp, 4 * Hp), jnp.float32)
        bias_pad = jnp.zeros((1, 4 * Hp), jnp.float32)
        for g in range(4):
            w_ih_pad = w_ih_pad.at[:, g * Hp:g * Hp + H].set(
                w_ih[g * H:(g + 1) * H, :].T)
            w_hh_pad = w_hh_pad.at[:H, g * Hp:g * Hp + H].set(
                w_hh[g * H:(g + 1) * H, :].T)
            bias_pad = bias_pad.at[0, g * Hp:g * Hp + H].set(
                b_ih[g * H:(g + 1) * H] + b_hh[g * H:(g + 1) * H])
        self.w_ih_pad = w_ih_pad
        self.w_hh_pad = w_hh_pad
        self.bias_pad = bias_pad

    def __call__(self, inputs):
        """inputs: (B, T) int32 token ids. Returns (hids, (h_n, c_n))."""
        return seq_encoder2_forward(inputs, self.embedding, self.w_ih_pad,
                                    self.w_hh_pad, self.bias_pad,
                                    hidden_size=self.hidden_size)


# ---------------------------------------------------------------------------
# Pure-JAX reference (same math as torch.nn.LSTM forward, batch_first).
# ---------------------------------------------------------------------------
def _reference_lstm(x_emb_bte, w_ih, w_hh, b_ih, b_hh):
    B, T, E = x_emb_bte.shape
    H = w_hh.shape[1]
    h0 = jnp.zeros((B, H), jnp.float32)
    c0 = jnp.zeros((B, H), jnp.float32)

    def step(carry, x_t):
        h, c = carry
        gates = x_t @ w_ih.T + h @ w_hh.T + b_ih + b_hh
        i = jax.nn.sigmoid(gates[:, :H])
        f = jax.nn.sigmoid(gates[:, H:2 * H])
        g = jnp.tanh(gates[:, 2 * H:3 * H])
        o = jax.nn.sigmoid(gates[:, 3 * H:])
        c = f * c + i * g
        h = o * jnp.tanh(c)
        return (h, c), h

    (h_n, c_n), hs = jax.lax.scan(step, (h0, c0),
                                  jnp.transpose(x_emb_bte, (1, 0, 2)))
    return jnp.transpose(hs, (1, 0, 2)), h_n, c_n


if __name__ == "__main__":
    VOCAB, EMB, HIDDEN = 50, 32, 32
    B, T = 2, 8

    key = jax.random.PRNGKey(0)
    k_params, k_tokens = jax.random.split(key)

    enc = SeqEncoder2Pallas(VOCAB, EMB, HIDDEN, k_params)
    tokens = jax.random.randint(k_tokens, (B, T), 0, VOCAB, dtype=jnp.int32)

    hids, (h_n, c_n) = enc(tokens)
    jax.block_until_ready((hids, h_n, c_n))

    assert hids.shape == (B, T, HIDDEN)
    assert h_n.shape == (B, HIDDEN)
    assert c_n.shape == (B, HIDDEN)

    # Correctness check against the pure-JAX reference.
    x_emb_ref = jnp.take(enc.embedding, tokens, axis=0)        # (B, T, E)
    r_hids, r_hn, r_cn = _reference_lstm(x_emb_ref, enc.w_ih, enc.w_hh,
                                         enc.b_ih, enc.b_hh)
    assert bool(jnp.allclose(hids, r_hids, atol=1e-3, rtol=1e-3))
    assert bool(jnp.allclose(h_n, r_hn, atol=1e-3, rtol=1e-3))
    assert bool(jnp.allclose(c_n, r_cn, atol=1e-3, rtol=1e-3))

    print("KERNEL_OK")
</pallas_src>

<mosaic_0001>
module attributes {stable_mosaic.version = 11 : i64} {
  func.func @_lstm_chunk_kernel(%arg0: i32, %arg1: memref<8x8x512xf32, #tpu.memory_space<vmem>>, %arg2: memref<128x512xf32, #tpu.memory_space<vmem>>, %arg3: memref<8x8x128xf32, #tpu.memory_space<vmem>>, %arg4: memref<8x128xf32, #tpu.memory_space<vmem>>, %arg5: memref<8x128xf32, #tpu.memory_space<vmem>>, %arg6: memref<8x128xf32, #tpu.memory_space<vmem>>, %arg7: memref<8x128xf32, #tpu.memory_space<vmem>>) attributes {dimension_semantics = [#tpu.dimension_semantics<arbitrary>], iteration_bounds = array<i64: 1>, scalar_prefetch = 0 : i64, scratch_operands = 2 : i64, tpu.core_type = #tpu.core_type<tc>, window_params = [{transform_indices = @transform_0, window_bounds = array<i64: 8, 8, 512>}, {pipeline_mode = #tpu.pipeline_mode<synchronous>, transform_indices = @transform_1, window_bounds = array<i64: 128, 512>}, {transform_indices = @transform_2, window_bounds = array<i64: 8, 8, 128>}, {pipeline_mode = #tpu.pipeline_mode<synchronous>, transform_indices = @transform_3, window_bounds = array<i64: 8, 128>}, {pipeline_mode = #tpu.pipeline_mode<synchronous>, transform_indices = @transform_4, window_bounds = array<i64: 8, 128>}]} {
    %c0_i32 = arith.constant 0 : i32
    %0 = arith.cmpi eq, %arg0, %c0_i32 : i32
    %1 = arith.extui %0 : i1 to i32
    %c0_i32_0 = arith.constant 0 : i32
    %2 = arith.cmpi ne, %1, %c0_i32_0 : i32
    scf.if %2 {
      %cst_132 = arith.constant 0.000000e+00 : f32
      %311 = vector.broadcast %cst_132 : f32 to vector<8x128xf32>
      %c0_133 = arith.constant 0 : index
      %c0_134 = arith.constant 0 : index
      %312 = vector.load %arg6[%c0_133, %c0_134] : memref<8x128xf32, #tpu.memory_space<vmem>>, vector<8x128xf32>
      tpu.vector_store %arg6[%c0_133, %c0_134], %311 {strides = array<i32>} : memref<8x128xf32, #tpu.memory_space<vmem>>, vector<8x128xf32>,
      %cst_135 = arith.constant 0.000000e+00 : f32
      %313 = vector.broadcast %cst_135 : f32 to vector<8x128xf32>
      %c0_136 = arith.constant 0 : index
      %c0_137 = arith.constant 0 : index
      %314 = vector.load %arg7[%c0_136, %c0_137] : memref<8x128xf32, #tpu.memory_space<vmem>>, vector<8x128xf32>
      tpu.vector_store %arg7[%c0_136, %c0_137], %313 {strides = array<i32>} : memref<8x128xf32, #tpu.memory_space<vmem>>, vector<8x128xf32>,
    } else {
    }
    %c0 = arith.constant 0 : index
    %c0_1 = arith.constant 0 : index
    %3 = vector.load %arg2[%c0, %c0_1] : memref<128x512xf32, #tpu.memory_space<vmem>>, vector<128x512xf32>
    %c0_i32_2 = arith.constant 0 : i32
    %c0_3 = arith.constant 0 : index
    %c0_4 = arith.constant 0 : index
    %4 = vector.load %arg6[%c0_3, %c0_4] : memref<8x128xf32, #tpu.memory_space<vmem>>, vector<8x128xf32>
    %c0_5 = arith.constant 0 : index
    %c0_6 = arith.constant 0 : index
    %5 = vector.load %arg7[%c0_5, %c0_6] : memref<8x128xf32, #tpu.memory_space<vmem>>, vector<8x128xf32>
    %6 = arith.index_cast %c0_i32_2 : i32 to index
    %c0_7 = arith.constant 0 : index
    %c0_8 = arith.constant 0 : index
    %7 = vector.load %arg1[%6, %c0_7, %c0_8] : memref<8x8x512xf32, #tpu.memory_space<vmem>>, vector<1x8x512xf32>
    %8 = vector.shape_cast %7 : vector<1x8x512xf32> to vector<8x512xf32>
    %cst = arith.constant dense<0.000000e+00> : vector<8x512xf32>
    %9 = tpu.matmul %4, %3, %cst {dimension_numbers = #tpu.dot_dimension_numbers<[1], [0], [0], [1], [0, 0, 1, 1], [], []>} : vector<8x128xf32>, vector<128x512xf32>, vector<8x512xf32> -> vector<8x512xf32>
    %10 = arith.addf %8, %9 : vector<8x512xf32>
    %11 = vector.extract_strided_slice %10 {offsets = [0, 0], sizes = [8, 128], strides = [1, 1]} : vector<8x512xf32> to vector<8x128xf32>
    %12 = arith.negf %11 : vector<8x128xf32>
    %13 = math.exp %12 : vector<8x128xf32>
    %cst_9 = arith.constant 1.000000e+00 : f32
    %14 = vector.broadcast %cst_9 : f32 to vector<8x128xf32>
    %15 = arith.addf %14, %13 : vector<8x128xf32>
    %16 = arith.divf %14, %15 : vector<8x128xf32>
    %17 = vector.extract_strided_slice %10 {offsets = [0, 128], sizes = [8, 128], strides = [1, 1]} : vector<8x512xf32> to vector<8x128xf32>
    %18 = arith.negf %17 : vector<8x128xf32>
    %19 = math.exp %18 : vector<8x128xf32>
    %cst_10 = arith.constant 1.000000e+00 : f32
    %20 = vector.broadcast %cst_10 : f32 to vector<8x128xf32>
    %21 = arith.addf %20, %19 : vector<8x128xf32>
    %22 = arith.divf %20, %21 : vector<8x128xf32>
    %23 = vector.extract_strided_slice %10 {offsets = [0, 256], sizes = [8, 128], strides = [1, 1]} : vector<8x512xf32> to vector<8x128xf32>
    %24 = math.tanh %23 : vector<8x128xf32>
    %25 = vector.extract_strided_slice %10 {offsets = [0, 384], sizes = [8, 128], strides = [1, 1]} : vector<8x512xf32> to vector<8x128xf32>
    %26 = arith.negf %25 : vector<8x128xf32>
    %27 = math.exp %26 : vector<8x128xf32>
    %cst_11 = arith.constant 1.000000e+00 : f32
    %28 = vector.broadcast %cst_11 : f32 to vector<8x128xf32>
    %29 = arith.addf %28, %27 : vector<8x128xf32>
    %30 = arith.divf %28, %29 : vector<8x128xf32>
    %31 = arith.mulf %22, %5 : vector<8x128xf32>
    %32 = arith.mulf %16, %24 : vector<8x128xf32>
    %33 = arith.addf %31, %32 : vector<8x128xf32>
    %34 = math.tanh %33 : vector<8x128xf32>
    %35 = arith.mulf %30, %34 : vector<8x128xf32>
    %c0_12 = arith.constant 0 : index
    %c0_13 = arith.constant 0 : index
    %36 = vector.load %arg6[%c0_12, %c0_13] : memref<8x128xf32, #tpu.memory_space<vmem>>, vector<8x128xf32>
    tpu.vector_store %arg6[%c0_12, %c0_13], %35 {strides = array<i32>} : memref<8x128xf32, #tpu.memory_space<vmem>>, vector<8x128xf32>,
    %c0_14 = arith.constant 0 : index
    %c0_15 = arith.constant 0 : index
    %37 = vector.load %arg7[%c0_14, %c0_15] : memref<8x128xf32, #tpu.memory_space<vmem>>, vector<8x128xf32>
    tpu.vector_store %arg7[%c0_14, %c0_15], %33 {strides = array<i32>} : memref<8x128xf32, #tpu.memory_space<vmem>>, vector<8x128xf32>,
    %38 = arith.index_cast %c0_i32_2 : i32 to index
    %c0_16 = arith.constant 0 : index
    %c0_17 = arith.constant 0 : index
    %39 = vector.load %arg3[%38, %c0_16, %c0_17] : memref<8x8x128xf32, #tpu.memory_space<vmem>>, vector<1x8x128xf32>
    %40 = vector.shape_cast %39 : vector<1x8x128xf32> to vector<8x128xf32>
    %41 = vector.shape_cast %35 : vector<8x128xf32> to vector<1x8x128xf32>
    tpu.vector_store %arg3[%38, %c0_16, %c0_17], %41 {strides = array<i32>} : memref<8x8x128xf32, #tpu.memory_space<vmem>>, vector<1x8x128xf32>,
    %c1_i32 = arith.constant 1 : i32
    %c0_18 = arith.constant 0 : index
    %c0_19 = arith.constant 0 : index
    %42 = vector.load %arg6[%c0_18, %c0_19] : memref<8x128xf32, #tpu.memory_space<vmem>>, vector<8x128xf32>
    %c0_20 = arith.constant 0 : index
    %c0_21 = arith.constant 0 : index
    %43 = vector.load %arg7[%c0_20, %c0_21] : memref<8x128xf32, #tpu.memory_space<vmem>>, vector<8x128xf32>
    %44 = arith.index_cast %c1_i32 : i32 to index
    %c0_22 = arith.constant 0 : index
    %c0_23 = arith.constant 0 : index
    %45 = vector.load %arg1[%44, %c0_22, %c0_23] : memref<8x8x512xf32, #tpu.memory_space<vmem>>, vector<1x8x512xf32>
    %46 = vector.shape_cast %45 : vector<1x8x512xf32> to vector<8x512xf32>
    %cst_24 = arith.constant dense<0.000000e+00> : vector<8x512xf32>
    %47 = tpu.matmul %42, %3, %cst_24 {dimension_numbers = #tpu.dot_dimension_numbers<[1], [0], [0], [1], [0, 0, 1, 1], [], []>} : vector<8x128xf32>, vector<128x512xf32>, vector<8x512xf32> -> vector<8x512xf32>
    %48 = arith.addf %46, %47 : vector<8x512xf32>
    %49 = vector.extract_strided_slice %48 {offsets = [0, 0], sizes = [8, 128], strides = [1, 1]} : vector<8x512xf32> to vector<8x128xf32>
    %50 = arith.negf %49 : vector<8x128xf32>
    %51 = math.exp %50 : vector<8x128xf32>
    %cst_25 = arith.constant 1.000000e+00 : f32
    %52 = vector.broadcast %cst_25 : f32 to vector<8x128xf32>
    %53 = arith.addf %52, %51 : vector<8x128xf32>
    %54 = arith.divf %52, %53 : vector<8x128xf32>
    %55 = vector.extract_strided_slice %48 {offsets = [0, 128], sizes = [8, 128], strides = [1, 1]} : vector<8x512xf32> to vector<8x128xf32>
    %56 = arith.negf %55 : vector<8x128xf32>
    %57 = math.exp %56 : vector<8x128xf32>
    %cst_26 = arith.constant 1.000000e+00 : f32
    %58 = vector.broadcast %cst_26 : f32 to vector<8x128xf32>
    %59 = arith.addf %58, %57 : vector<8x128xf32>
    %60 = arith.divf %58, %59 : vector<8x128xf32>
    %61 = vector.extract_strided_slice %48 {offsets = [0, 256], sizes = [8, 128], strides = [1, 1]} : vector<8x512xf32> to vector<8x128xf32>
    %62 = math.tanh %61 : vector<8x128xf32>
    %63 = vector.extract_strided_slice %48 {offsets = [0, 384], sizes = [8, 128], strides = [1, 1]} : vector<8x512xf32> to vector<8x128xf32>
    %64 = arith.negf %63 : vector<8x128xf32>
    %65 = math.exp %64 : vector<8x128xf32>
    %cst_27 = arith.constant 1.000000e+00 : f32
    %66 = vector.broadcast %cst_27 : f32 to vector<8x128xf32>
    %67 = arith.addf %66, %65 : vector<8x128xf32>
    %68 = arith.divf %66, %67 : vector<8x128xf32>
    %69 = arith.mulf %60, %43 : vector<8x128xf32>
    %70 = arith.mulf %54, %62 : vector<8x128xf32>
    %71 = arith.addf %69, %70 : vector<8x128xf32>
    %72 = math.tanh %71 : vector<8x128xf32>
    %73 = arith.mulf %68, %72 : vector<8x128xf32>
    %c0_28 = arith.constant 0 : index
    %c0_29 = arith.constant 0 : index
    %74 = vector.load %arg6[%c0_28, %c0_29] : memref<8x128xf32, #tpu.memory_space<vmem>>, vector<8x128xf32>
    tpu.vector_store %arg6[%c0_28, %c0_29], %73 {strides = array<i32>} : memref<8x128xf32, #tpu.memory_space<vmem>>, vector<8x128xf32>,
    %c0_30 = arith.constant 0 : index
    %c0_31 = arith.constant 0 : index
    %75 = vector.load %arg7[%c0_30, %c0_31] : memref<8x128xf32, #tpu.memory_space<vmem>>, vector<8x128xf32>
    tpu.vector_store %arg7[%c0_30, %c0_31], %71 {strides = array<i32>} : memref<8x128xf32, #tpu.memory_space<vmem>>, vector<8x128xf32>,
    %76 = arith.index_cast %c1_i32 : i32 to index
    %c0_32 = arith.constant 0 : index
    %c0_33 = arith.constant 0 : index
    %77 = vector.load %arg3[%76, %c0_32, %c0_33] : memref<8x8x128xf32, #tpu.memory_space<vmem>>, vector<1x8x128xf32>
    %78 = vector.shape_cast %77 : vector<1x8x128xf32> to vector<8x128xf32>
    %79 = vector.shape_cast %73 : vector<8x128xf32> to vector<1x8x128xf32>
    tpu.vector_store %arg3[%76, %c0_32, %c0_33], %79 {strides = array<i32>} : memref<8x8x128xf32, #tpu.memory_space<vmem>>, vector<1x8x128xf32>,
    %c2_i32 = arith.constant 2 : i32
    %c0_34 = arith.constant 0 : index
    %c0_35 = arith.constant 0 : index
    %80 = vector.load %arg6[%c0_34, %c0_35] : memref<8x128xf32, #tpu.memory_space<vmem>>, vector<8x128xf32>
    %c0_36 = arith.constant 0 : index
    %c0_37 = arith.constant 0 : index
    %81 = vector.load %arg7[%c0_36, %c0_37] : memref<8x128xf32, #tpu.memory_space<vmem>>, vector<8x128xf32>
    %82 = arith.index_cast %c2_i32 : i32 to index
    %c0_38 = arith.constant 0 : index
    %c0_39 = arith.constant 0 : index
    %83 = vector.load %arg1[%82, %c0_38, %c0_39] : memref<8x8x512xf32, #tpu.memory_space<vmem>>, vector<1x8x512xf32>
    %84 = vector.shape_cast %83 : vector<1x8x512xf32> to vector<8x512xf32>
    %cst_40 = arith.constant dense<0.000000e+00> : vector<8x512xf32>
    %85 = tpu.matmul %80, %3, %cst_40 {dimension_numbers = #tpu.dot_dimension_numbers<[1], [0], [0], [1], [0, 0, 1, 1], [], []>} : vector<8x128xf32>, vector<128x512xf32>, vector<8x512xf32> -> vector<8x512xf32>
    %86 = arith.addf %84, %85 : vector<8x512xf32>
    %87 = vector.extract_strided_slice %86 {offsets = [0, 0], sizes = [8, 128], strides = [1, 1]} : vector<8x512xf32> to vector<8x128xf32>
    %88 = arith.negf %87 : vector<8x128xf32>
    %89 = math.exp %88 : vector<8x128xf32>
    %cst_41 = arith.constant 1.000000e+00 : f32
    %90 = vector.broadcast %cst_41 : f32 to vector<8x128xf32>
    %91 = arith.addf %90, %89 : vector<8x128xf32>
    %92 = arith.divf %90, %91 : vector<8x128xf32>
    %93 = vector.extract_strided_slice %86 {offsets = [0, 128], sizes = [8, 128], strides = [1, 1]} : vector<8x512xf32> to vector<8x128xf32>
    %94 = arith.negf %93 : vector<8x128xf32>
    %95 = math.exp %94 : vector<8x128xf32>
    %cst_42 = arith.constant 1.000000e+00 : f32
    %96 = vector.broadcast %cst_42 : f32 to vector<8x128xf32>
    %97 = arith.addf %96, %95 : vector<8x128xf32>
    %98 = arith.divf %96, %97 : vector<8x128xf32>
    %99 = vector.extract_strided_slice %86 {offsets = [0, 256], sizes = [8, 128], strides = [1, 1]} : vector<8x512xf32> to vector<8x128xf32>
    %100 = math.tanh %99 : vector<8x128xf32>
    %101 = vector.extract_strided_slice %86 {offsets = [0, 384], sizes = [8, 128], strides = [1, 1]} : vector<8x512xf32> to vector<8x128xf32>
    %102 = arith.negf %101 : vector<8x128xf32>
    %103 = math.exp %102 : vector<8x128xf32>
    %cst_43 = arith.constant 1.000000e+00 : f32
    %104 = vector.broadcast %cst_43 : f32 to vector<8x128xf32>
    %105 = arith.addf %104, %103 : vector<8x128xf32>
    %106 = arith.divf %104, %105 : vector<8x128xf32>
    %107 = arith.mulf %98, %81 : vector<8x128xf32>
    %108 = arith.mulf %92, %100 : vector<8x128xf32>
    %109 = arith.addf %107, %108 : vector<8x128xf32>
    %110 = math.tanh %109 : vector<8x128xf32>
    %111 = arith.mulf %106, %110 : vector<8x128xf32>
    %c0_44 = arith.constant 0 : index
    %c0_45 = arith.constant 0 : index
    %112 = vector.load %arg6[%c0_44, %c0_45] : memref<8x128xf32, #tpu.memory_space<vmem>>, vector<8x128xf32>
    tpu.vector_store %arg6[%c0_44, %c0_45], %111 {strides = array<i32>} : memref<8x128xf32, #tpu.memory_space<vmem>>, vector<8x128xf32>,
    %c0_46 = arith.constant 0 : index
    %c0_47 = arith.constant 0 : index
    %113 = vector.load %arg7[%c0_46, %c0_47] : memref<8x128xf32, #tpu.memory_space<vmem>>, vector<8x128xf32>
    tpu.vector_store %arg7[%c0_46, %c0_47], %109 {strides = array<i32>} : memref<8x128xf32, #tpu.memory_space<vmem>>, vector<8x128xf32>,
    %114 = arith.index_cast %c2_i32 : i32 to index
    %c0_48 = arith.constant 0 : index
    %c0_49 = arith.constant 0 : index
    %115 = vector.load %arg3[%114, %c0_48, %c0_49] : memref<8x8x128xf32, #tpu.memory_space<vmem>>, vector<1x8x128xf32>
    %116 = vector.shape_cast %115 : vector<1x8x128xf32> to vector<8x128xf32>
    %117 = vector.shape_cast %111 : vector<8x128xf32> to vector<1x8x128xf32>
    tpu.vector_store %arg3[%114, %c0_48, %c0_49], %117 {strides = array<i32>} : memref<8x8x128xf32, #tpu.memory_space<vmem>>, vector<1x8x128xf32>,
    %c3_i32 = arith.constant 3 : i32
    %c0_50 = arith.constant 0 : index
    %c0_51 = arith.constant 0 : index
    %118 = vector.load %arg6[%c0_50, %c0_51] : memref<8x128xf32, #tpu.memory_space<vmem>>, vector<8x128xf32>
    %c0_52 = arith.constant 0 : index
    %c0_53 = arith.constant 0 : index
    %119 = vector.load %arg7[%c0_52, %c0_53] : memref<8x128xf32, #tpu.memory_space<vmem>>, vector<8x128xf32>
    %120 = arith.index_cast %c3_i32 : i32 to index
    %c0_54 = arith.constant 0 : index
    %c0_55 = arith.constant 0 : index
    %121 = vector.load %arg1[%120, %c0_54, %c0_55] : memref<8x8x512xf32, #tpu.memory_space<vmem>>, vector<1x8x512xf32>
    %122 = vector.shape_cast %121 : vector<1x8x512xf32> to vector<8x512xf32>
    %cst_56 = arith.constant dense<0.000000e+00> : vector<8x512xf32>
    %123 = tpu.matmul %118, %3, %cst_56 {dimension_numbers = #tpu.dot_dimension_numbers<[1], [0], [0], [1], [0, 0, 1, 1], [], []>} : vector<8x128xf32>, vector<128x512xf32>, vector<8x512xf32> -> vector<8x512xf32>
    %124 = arith.addf %122, %123 : vector<8x512xf32>
    %125 = vector.extract_strided_slice %124 {offsets = [0, 0], sizes = [8, 128], strides = [1, 1]} : vector<8x512xf32> to vector<8x128xf32>
    %126 = arith.negf %125 : vector<8x128xf32>
    %127 = math.exp %126 : vector<8x128xf32>
    %cst_57 = arith.constant 1.000000e+00 : f32
    %128 = vector.broadcast %cst_57 : f32 to vector<8x128xf32>
    %129 = arith.addf %128, %127 : vector<8x128xf32>
    %130 = arith.divf %128, %129 : vector<8x128xf32>
    %131 = vector.extract_strided_slice %124 {offsets = [0, 128], sizes = [8, 128], strides = [1, 1]} : vector<8x512xf32> to vector<8x128xf32>
    %132 = arith.negf %131 : vector<8x128xf32>
    %133 = math.exp %132 : vector<8x128xf32>
    %cst_58 = arith.constant 1.000000e+00 : f32
    %134 = vector.broadcast %cst_58 : f32 to vector<8x128xf32>
    %135 = arith.addf %134, %133 : vector<8x128xf32>
    %136 = arith.divf %134, %135 : vector<8x128xf32>
    %137 = vector.extract_strided_slice %124 {offsets = [0, 256], sizes = [8, 128], strides = [1, 1]} : vector<8x512xf32> to vector<8x128xf32>
    %138 = math.tanh %137 : vector<8x128xf32>
    %139 = vector.extract_strided_slice %124 {offsets = [0, 384], sizes = [8, 128], strides = [1, 1]} : vector<8x512xf32> to vector<8x128xf32>
    %140 = arith.negf %139 : vector<8x128xf32>
    %141 = math.exp %140 : vector<8x128xf32>
    %cst_59 = arith.constant 1.000000e+00 : f32
    %142 = vector.broadcast %cst_59 : f32 to vector<8x128xf32>
    %143 = arith.addf %142, %141 : vector<8x128xf32>
    %144 = arith.divf %142, %143 : vector<8x128xf32>
    %145 = arith.mulf %136, %119 : vector<8x128xf32>
    %146 = arith.mulf %130, %138 : vector<8x128xf32>
    %147 = arith.addf %145, %146 : vector<8x128xf32>
    %148 = math.tanh %147 : vector<8x128xf32>
    %149 = arith.mulf %144, %148 : vector<8x128xf32>
    %c0_60 = arith.constant 0 : index
    %c0_61 = arith.constant 0 : index
    %150 = vector.load %arg6[%c0_60, %c0_61] : memref<8x128xf32, #tpu.memory_space<vmem>>, vector<8x128xf32>
    tpu.vector_store %arg6[%c0_60, %c0_61], %149 {strides = array<i32>} : memref<8x128xf32, #tpu.memory_space<vmem>>, vector<8x128xf32>,
    %c0_62 = arith.constant 0 : index
    %c0_63 = arith.constant 0 : index
    %151 = vector.load %arg7[%c0_62, %c0_63] : memref<8x128xf32, #tpu.memory_space<vmem>>, vector<8x128xf32>
    tpu.vector_store %arg7[%c0_62, %c0_63], %147 {strides = array<i32>} : memref<8x128xf32, #tpu.memory_space<vmem>>, vector<8x128xf32>,
    %152 = arith.index_cast %c3_i32 : i32 to index
    %c0_64 = arith.constant 0 : index
    %c0_65 = arith.constant 0 : index
    %153 = vector.load %arg3[%152, %c0_64, %c0_65] : memref<8x8x128xf32, #tpu.memory_space<vmem>>, vector<1x8x128xf32>
    %154 = vector.shape_cast %153 : vector<1x8x128xf32> to vector<8x128xf32>
    %155 = vector.shape_cast %149 : vector<8x128xf32> to vector<1x8x128xf32>
    tpu.vector_store %arg3[%152, %c0_64, %c0_65], %155 {strides = array<i32>} : memref<8x8x128xf32, #tpu.memory_space<vmem>>, vector<1x8x128xf32>,
    %c4_i32 = arith.constant 4 : i32
    %c0_66 = arith.constant 0 : index
    %c0_67 = arith.constant 0 : index
    %156 = vector.load %arg6[%c0_66, %c0_67] : memref<8x128xf32, #tpu.memory_space<vmem>>, vector<8x128xf32>
    %c0_68 = arith.constant 0 : index
    %c0_69 = arith.constant 0 : index
    %157 = vector.load %arg7[%c0_68, %c0_69] : memref<8x128xf32, #tpu.memory_space<vmem>>, vector<8x128xf32>
    %158 = arith.index_cast %c4_i32 : i32 to index
    %c0_70 = arith.constant 0 : index
    %c0_71 = arith.constant 0 : index
    %159 = vector.load %arg1[%158, %c0_70, %c0_71] : memref<8x8x512xf32, #tpu.memory_space<vmem>>, vector<1x8x512xf32>
    %160 = vector.shape_cast %159 : vector<1x8x512xf32> to vector<8x512xf32>
    %cst_72 = arith.constant dense<0.000000e+00> : vector<8x512xf32>
    %161 = tpu.matmul %156, %3, %cst_72 {dimension_numbers = #tpu.dot_dimension_numbers<[1], [0], [0], [1], [0, 0, 1, 1], [], []>} : vector<8x128xf32>, vector<128x512xf32>, vector<8x512xf32> -> vector<8x512xf32>
    %162 = arith.addf %160, %161 : vector<8x512xf32>
    %163 = vector.extract_strided_slice %162 {offsets = [0, 0], sizes = [8, 128], strides = [1, 1]} : vector<8x512xf32> to vector<8x128xf32>
    %164 = arith.negf %163 : vector<8x128xf32>
    %165 = math.exp %164 : vector<8x128xf32>
    %cst_73 = arith.constant 1.000000e+00 : f32
    %166 = vector.broadcast %cst_73 : f32 to vector<8x128xf32>
    %167 = arith.addf %166, %165 : vector<8x128xf32>
    %168 = arith.divf %166, %167 : vector<8x128xf32>
    %169 = vector.extract_strided_slice %162 {offsets = [0, 128], sizes = [8, 128], strides = [1, 1]} : vector<8x512xf32> to vector<8x128xf32>
    %170 = arith.negf %169 : vector<8x128xf32>
    %171 = math.exp %170 : vector<8x128xf32>
    %cst_74 = arith.constant 1.000000e+00 : f32
    %172 = vector.broadcast %cst_74 : f32 to vector<8x128xf32>
    %173 = arith.addf %172, %171 : vector<8x128xf32>
    %174 = arith.divf %172, %173 : vector<8x128xf32>
    %175 = vector.extract_strided_slice %162 {offsets = [0, 256], sizes = [8, 128], strides = [1, 1]} : vector<8x512xf32> to vector<8x128xf32>
    %176 = math.tanh %175 : vector<8x128xf32>
    %177 = vector.extract_strided_slice %162 {offsets = [0, 384], sizes = [8, 128], strides = [1, 1]} : vector<8x512xf32> to vector<8x128xf32>
    %178 = arith.negf %177 : vector<8x128xf32>
    %179 = math.exp %178 : vector<8x128xf32>
    %cst_75 = arith.constant 1.000000e+00 : f32
    %180 = vector.broadcast %cst_75 : f32 to vector<8x128xf32>
    %181 = arith.addf %180, %179 : vector<8x128xf32>
    %182 = arith.divf %180, %181 : vector<8x128xf32>
    %183 = arith.mulf %174, %157 : vector<8x128xf32>
    %184 = arith.mulf %168, %176 : vector<8x128xf32>
    %185 = arith.addf %183, %184 : vector<8x128xf32>
    %186 = math.tanh %185 : vector<8x128xf32>
    %187 = arith.mulf %182, %186 : vector<8x128xf32>
    %c0_76 = arith.constant 0 : index
    %c0_77 = arith.constant 0 : index
    %188 = vector.load %arg6[%c0_76, %c0_77] : memref<8x128xf32, #tpu.memory_space<vmem>>, vector<8x128xf32>
    tpu.vector_store %arg6[%c0_76, %c0_77], %187 {strides = array<i32>} : memref<8x128xf32, #tpu.memory_space<vmem>>, vector<8x128xf32>,
    %c0_78 = arith.constant 0 : index
    %c0_79 = arith.constant 0 : index
    %189 = vector.load %arg7[%c0_78, %c0_79] : memref<8x128xf32, #tpu.memory_space<vmem>>, vector<8x128xf32>
    tpu.vector_store %arg7[%c0_78, %c0_79], %185 {strides = array<i32>} : memref<8x128xf32, #tpu.memory_space<vmem>>, vector<8x128xf32>,
    %190 = arith.index_cast %c4_i32 : i32 to index
    %c0_80 = arith.constant 0 : index
    %c0_81 = arith.constant 0 : index
    %191 = vector.load %arg3[%190, %c0_80, %c0_81] : memref<8x8x128xf32, #tpu.memory_space<vmem>>, vector<1x8x128xf32>
    %192 = vector.shape_cast %191 : vector<1x8x128xf32> to vector<8x128xf32>
    %193 = vector.shape_cast %187 : vector<8x128xf32> to vector<1x8x128xf32>
    tpu.vector_store %arg3[%190, %c0_80, %c0_81], %193 {strides = array<i32>} : memref<8x8x128xf32, #tpu.memory_space<vmem>>, vector<1x8x128xf32>,
    %c5_i32 = arith.constant 5 : i32
    %c0_82 = arith.constant 0 : index
    %c0_83 = arith.constant 0 : index
    %194 = vector.load %arg6[%c0_82, %c0_83] : memref<8x128xf32, #tpu.memory_space<vmem>>, vector<8x128xf32>
    %c0_84 = arith.constant 0 : index
    %c0_85 = arith.constant 0 : index
    %195 = vector.load %arg7[%c0_84, %c0_85] : memref<8x128xf32, #tpu.memory_space<vmem>>, vector<8x128xf32>
    %196 = arith.index_cast %c5_i32 : i32 to index
    %c0_86 = arith.constant 0 : index
    %c0_87 = arith.constant 0 : index
    %197 = vector.load %arg1[%196, %c0_86, %c0_87] : memref<8x8x512xf32, #tpu.memory_space<vmem>>, vector<1x8x512xf32>
    %198 = vector.shape_cast %197 : vector<1x8x512xf32> to vector<8x512xf32>
    %cst_88 = arith.constant dense<0.000000e+00> : vector<8x512xf32>
    %199 = tpu.matmul %194, %3, %cst_88 {dimension_numbers = #tpu.dot_dimension_numbers<[1], [0], [0], [1], [0, 0, 1, 1], [], []>} : vector<8x128xf32>, vector<128x512xf32>, vector<8x512xf32> -> vector<8x512xf32>
    %200 = arith.addf %198, %199 : vector<8x512xf32>
    %201 = vector.extract_strided_slice %200 {offsets = [0, 0], sizes = [8, 128], strides = [1, 1]} : vector<8x512xf32> to vector<8x128xf32>
    %202 = arith.negf %201 : vector<8x128xf32>
    %203 = math.exp %202 : vector<8x128xf32>
    %cst_89 = arith.constant 1.000000e+00 : f32
    %204 = vector.broadcast %cst_89 : f32 to vector<8x128xf32>
    %205 = arith.addf %204, %203 : vector<8x128xf32>
    %206 = arith.divf %204, %205 : vector<8x128xf32>
    %207 = vector.extract_strided_slice %200 {offsets = [0, 128], sizes = [8, 128], strides = [1, 1]} : vector<8x512xf32> to vector<8x128xf32>
    %208 = arith.negf %207 : vector<8x128xf32>
    %209 = math.exp %208 : vector<8x128xf32>
    %cst_90 = arith.constant 1.000000e+00 : f32
    %210 = vector.broadcast %cst_90 : f32 to vector<8x128xf32>
    %211 = arith.addf %210, %209 : vector<8x128xf32>
    %212 = arith.divf %210, %211 : vector<8x128xf32>
    %213 = vector.extract_strided_slice %200 {offsets = [0, 256], sizes = [8, 128], strides = [1, 1]} : vector<8x512xf32> to vector<8x128xf32>
    %214 = math.tanh %213 : vector<8x128xf32>
    %215 = vector.extract_strided_slice %200 {offsets = [0, 384], sizes = [8, 128], strides = [1, 1]} : vector<8x512xf32> to vector<8x128xf32>
    %216 = arith.negf %215 : vector<8x128xf32>
    %217 = math.exp %216 : vector<8x128xf32>
    %cst_91 = arith.constant 1.000000e+00 : f32
    %218 = vector.broadcast %cst_91 : f32 to vector<8x128xf32>
    %219 = arith.addf %218, %217 : vector<8x128xf32>
    %220 = arith.divf %218, %219 : vector<8x128xf32>
    %221 = arith.mulf %212, %195 : vector<8x128xf32>
    %222 = arith.mulf %206, %214 : vector<8x128xf32>
    %223 = arith.addf %221, %222 : vector<8x128xf32>
    %224 = math.tanh %223 : vector<8x128xf32>
    %225 = arith.mulf %220, %224 : vector<8x128xf32>
    %c0_92 = arith.constant 0 : index
    %c0_93 = arith.constant 0 : index
    %226 = vector.load %arg6[%c0_92, %c0_93] : memref<8x128xf32, #tpu.memory_space<vmem>>, vector<8x128xf32>
    tpu.vector_store %arg6[%c0_92, %c0_93], %225 {strides = array<i32>} : memref<8x128xf32, #tpu.memory_space<vmem>>, vector<8x128xf32>,
    %c0_94 = arith.constant 0 : index
    %c0_95 = arith.constant 0 : index
    %227 = vector.load %arg7[%c0_94, %c0_95] : memref<8x128xf32, #tpu.memory_space<vmem>>, vector<8x128xf32>
    tpu.vector_store %arg7[%c0_94, %c0_95], %223 {strides = array<i32>} : memref<8x128xf32, #tpu.memory_space<vmem>>, vector<8x128xf32>,
    %228 = arith.index_cast %c5_i32 : i32 to index
    %c0_96 = arith.constant 0 : index
    %c0_97 = arith.constant 0 : index
    %229 = vector.load %arg3[%228, %c0_96, %c0_97] : memref<8x8x128xf32, #tpu.memory_space<vmem>>, vector<1x8x128xf32>
    %230 = vector.shape_cast %229 : vector<1x8x128xf32> to vector<8x128xf32>
    %231 = vector.shape_cast %225 : vector<8x128xf32> to vector<1x8x128xf32>
    tpu.vector_store %arg3[%228, %c0_96, %c0_97], %231 {strides = array<i32>} : memref<8x8x128xf32, #tpu.memory_space<vmem>>, vector<1x8x128xf32>,
    %c6_i32 = arith.constant 6 : i32
    %c0_98 = arith.constant 0 : index
    %c0_99 = arith.constant 0 : index
    %232 = vector.load %arg6[%c0_98, %c0_99] : memref<8x128xf32, #tpu.memory_space<vmem>>, vector<8x128xf32>
    %c0_100 = arith.constant 0 : index
    %c0_101 = arith.constant 0 : index
    %233 = vector.load %arg7[%c0_100, %c0_101] : memref<8x128xf32, #tpu.memory_space<vmem>>, vector<8x128xf32>
    %234 = arith.index_cast %c6_i32 : i32 to index
    %c0_102 = arith.constant 0 : index
    %c0_103 = arith.constant 0 : index
    %235 = vector.load %arg1[%234, %c0_102, %c0_103] : memref<8x8x512xf32, #tpu.memory_space<vmem>>, vector<1x8x512xf32>
    %236 = vector.shape_cast %235 : vector<1x8x512xf32> to vector<8x512xf32>
    %cst_104 = arith.constant dense<0.000000e+00> : vector<8x512xf32>
    %237 = tpu.matmul %232, %3, %cst_104 {dimension_numbers = #tpu.dot_dimension_numbers<[1], [0], [0], [1], [0, 0, 1, 1], [], []>} : vector<8x128xf32>, vector<128x512xf32>, vector<8x512xf32> -> vector<8x512xf32>
    %238 = arith.addf %236, %237 : vector<8x512xf32>
    %239 = vector.extract_strided_slice %238 {offsets = [0, 0], sizes = [8, 128], strides = [1, 1]} : vector<8x512xf32> to vector<8x128xf32>
    %240 = arith.negf %239 : vector<8x128xf32>
    %241 = math.exp %240 : vector<8x128xf32>
    %cst_105 = arith.constant 1.000000e+00 : f32
    %242 = vector.broadcast %cst_105 : f32 to vector<8x128xf32>
    %243 = arith.addf %242, %241 : vector<8x128xf32>
    %244 = arith.divf %242, %243 : vector<8x128xf32>
    %245 = vector.extract_strided_slice %238 {offsets = [0, 128], sizes = [8, 128], strides = [1, 1]} : vector<8x512xf32> to vector<8x128xf32>
    %246 = arith.negf %245 : vector<8x128xf32>
    %247 = math.exp %246 : vector<8x128xf32>
    %cst_106 = arith.constant 1.000000e+00 : f32
    %248 = vector.broadcast %cst_106 : f32 to vector<8x128xf32>
    %249 = arith.addf %248, %247 : vector<8x128xf32>
    %250 = arith.divf %248, %249 : vector<8x128xf32>
    %251 = vector.extract_strided_slice %238 {offsets = [0, 256], sizes = [8, 128], strides = [1, 1]} : vector<8x512xf32> to vector<8x128xf32>
    %252 = math.tanh %251 : vector<8x128xf32>
    %253 = vector.extract_strided_slice %238 {offsets = [0, 384], sizes = [8, 128], strides = [1, 1]} : vector<8x512xf32> to vector<8x128xf32>
    %254 = arith.negf %253 : vector<8x128xf32>
    %255 = math.exp %254 : vector<8x128xf32>
    %cst_107 = arith.constant 1.000000e+00 : f32
    %256 = vector.broadcast %cst_107 : f32 to vector<8x128xf32>
    %257 = arith.addf %256, %255 : vector<8x128xf32>
    %258 = arith.divf %256, %257 : vector<8x128xf32>
    %259 = arith.mulf %250, %233 : vector<8x128xf32>
    %260 = arith.mulf %244, %252 : vector<8x128xf32>
    %261 = arith.addf %259, %260 : vector<8x128xf32>
    %262 = math.tanh %261 : vector<8x128xf32>
    %263 = arith.mulf %258, %262 : vector<8x128xf32>
    %c0_108 = arith.constant 0 : index
    %c0_109 = arith.constant 0 : index
    %264 = vector.load %arg6[%c0_108, %c0_109] : memref<8x128xf32, #tpu.memory_space<vmem>>, vector<8x128xf32>
    tpu.vector_store %arg6[%c0_108, %c0_109], %263 {strides = array<i32>} : memref<8x128xf32, #tpu.memory_space<vmem>>, vector<8x128xf32>,
    %c0_110 = arith.constant 0 : index
    %c0_111 = arith.constant 0 : index
    %265 = vector.load %arg7[%c0_110, %c0_111] : memref<8x128xf32, #tpu.memory_space<vmem>>, vector<8x128xf32>
    tpu.vector_store %arg7[%c0_110, %c0_111], %261 {strides = array<i32>} : memref<8x128xf32, #tpu.memory_space<vmem>>, vector<8x128xf32>,
    %266 = arith.index_cast %c6_i32 : i32 to index
    %c0_112 = arith.constant 0 : index
    %c0_113 = arith.constant 0 : index
    %267 = vector.load %arg3[%266, %c0_112, %c0_113] : memref<8x8x128xf32, #tpu.memory_space<vmem>>, vector<1x8x128xf32>
    %268 = vector.shape_cast %267 : vector<1x8x128xf32> to vector<8x128xf32>
    %269 = vector.shape_cast %263 : vector<8x128xf32> to vector<1x8x128xf32>
    tpu.vector_store %arg3[%266, %c0_112, %c0_113], %269 {strides = array<i32>} : memref<8x8x128xf32, #tpu.memory_space<vmem>>, vector<1x8x128xf32>,
    %c7_i32 = arith.constant 7 : i32
    %c0_114 = arith.constant 0 : index
    %c0_115 = arith.constant 0 : index
    %270 = vector.load %arg6[%c0_114, %c0_115] : memref<8x128xf32, #tpu.memory_space<vmem>>, vector<8x128xf32>
    %c0_116 = arith.constant 0 : index
    %c0_117 = arith.constant 0 : index
    %271 = vector.load %arg7[%c0_116, %c0_117] : memref<8x128xf32, #tpu.memory_space<vmem>>, vector<8x128xf32>
    %272 = arith.index_cast %c7_i32 : i32 to index
    %c0_118 = arith.constant 0 : index
    %c0_119 = arith.constant 0 : index
    %273 = vector.load %arg1[%272, %c0_118, %c0_119] : memref<8x8x512xf32, #tpu.memory_space<vmem>>, vector<1x8x512xf32>
    %274 = vector.shape_cast %273 : vector<1x8x512xf32> to vector<8x512xf32>
    %cst_120 = arith.constant dense<0.000000e+00> : vector<8x512xf32>
    %275 = tpu.matmul %270, %3, %cst_120 {dimension_numbers = #tpu.dot_dimension_numbers<[1], [0], [0], [1], [0, 0, 1, 1], [], []>} : vector<8x128xf32>, vector<128x512xf32>, vector<8x512xf32> -> vector<8x512xf32>
    %276 = arith.addf %274, %275 : vector<8x512xf32>
    %277 = vector.extract_strided_slice %276 {offsets = [0, 0], sizes = [8, 128], strides = [1, 1]} : vector<8x512xf32> to vector<8x128xf32>
    %278 = arith.negf %277 : vector<8x128xf32>
    %279 = math.exp %278 : vector<8x128xf32>
    %cst_121 = arith.constant 1.000000e+00 : f32
    %280 = vector.broadcast %cst_121 : f32 to vector<8x128xf32>
    %281 = arith.addf %280, %279 : vector<8x128xf32>
    %282 = arith.divf %280, %281 : vector<8x128xf32>
    %283 = vector.extract_strided_slice %276 {offsets = [0, 128], sizes = [8, 128], strides = [1, 1]} : vector<8x512xf32> to vector<8x128xf32>
    %284 = arith.negf %283 : vector<8x128xf32>
    %285 = math.exp %284 : vector<8x128xf32>
    %cst_122 = arith.constant 1.000000e+00 : f32
    %286 = vector.broadcast %cst_122 : f32 to vector<8x128xf32>
    %287 = arith.addf %286, %285 : vector<8x128xf32>
    %288 = arith.divf %286, %287 : vector<8x128xf32>
    %289 = vector.extract_strided_slice %276 {offsets = [0, 256], sizes = [8, 128], strides = [1, 1]} : vector<8x512xf32> to vector<8x128xf32>
    %290 = math.tanh %289 : vector<8x128xf32>
    %291 = vector.extract_strided_slice %276 {offsets = [0, 384], sizes = [8, 128], strides = [1, 1]} : vector<8x512xf32> to vector<8x128xf32>
    %292 = arith.negf %291 : vector<8x128xf32>
    %293 = math.exp %292 : vector<8x128xf32>
    %cst_123 = arith.constant 1.000000e+00 : f32
    %294 = vector.broadcast %cst_123 : f32 to vector<8x128xf32>
    %295 = arith.addf %294, %293 : vector<8x128xf32>
    %296 = arith.divf %294, %295 : vector<8x128xf32>
    %297 = arith.mulf %288, %271 : vector<8x128xf32>
    %298 = arith.mulf %282, %290 : vector<8x128xf32>
    %299 = arith.addf %297, %298 : vector<8x128xf32>
    %300 = math.tanh %299 : vector<8x128xf32>
    %301 = arith.mulf %296, %300 : vector<8x128xf32>
    %c0_124 = arith.constant 0 : index
    %c0_125 = arith.constant 0 : index
    %302 = vector.load %arg6[%c0_124, %c0_125] : memref<8x128xf32, #tpu.memory_space<vmem>>, vector<8x128xf32>
    tpu.vector_store %arg6[%c0_124, %c0_125], %301 {strides = array<i32>} : memref<8x128xf32, #tpu.memory_space<vmem>>, vector<8x128xf32>,
    %c0_126 = arith.constant 0 : index
    %c0_127 = arith.constant 0 : index
    %303 = vector.load %arg7[%c0_126, %c0_127] : memref<8x128xf32, #tpu.memory_space<vmem>>, vector<8x128xf32>
    tpu.vector_store %arg7[%c0_126, %c0_127], %299 {strides = array<i32>} : memref<8x128xf32, #tpu.memory_space<vmem>>, vector<8x128xf32>,
    %304 = arith.index_cast %c7_i32 : i32 to index
    %c0_128 = arith.constant 0 : index
    %c0_129 = arith.constant 0 : index
    %305 = vector.load %arg3[%304, %c0_128, %c0_129] : memref<8x8x128xf32, #tpu.memory_space<vmem>>, vector<1x8x128xf32>
    %306 = vector.shape_cast %305 : vector<1x8x128xf32> to vector<8x128xf32>
    %307 = vector.shape_cast %301 : vector<8x128xf32> to vector<1x8x128xf32>
    tpu.vector_store %arg3[%304, %c0_128, %c0_129], %307 {strides = array<i32>} : memref<8x8x128xf32, #tpu.memory_space<vmem>>, vector<1x8x128xf32>,
    %c8_i32 = arith.constant 8 : i32
    %c0_i32_130 = arith.constant 0 : i32
    %308 = arith.cmpi eq, %arg0, %c0_i32_130 : i32
    %309 = arith.extui %308 : i1 to i32
    %c0_i32_131 = arith.constant 0 : i32
    %310 = arith.cmpi ne, %309, %c0_i32_131 : i32
    scf.if %310 {
      %c0_132 = arith.constant 0 : index
      %c0_133 = arith.constant 0 : index
      %311 = vector.load %arg6[%c0_132, %c0_133] : memref<8x128xf32, #tpu.memory_space<vmem>>, vector<8x128xf32>
      %c0_134 = arith.constant 0 : index
      %c0_135 = arith.constant 0 : index
      %312 = vector.load %arg4[%c0_134, %c0_135] : memref<8x128xf32, #tpu.memory_space<vmem>>, vector<8x128xf32>
      tpu.vector_store %arg4[%c0_134, %c0_135], %311 {strides = array<i32>} : memref<8x128xf32, #tpu.memory_space<vmem>>, vector<8x128xf32>,
      %c0_136 = arith.constant 0 : index
      %c0_137 = arith.constant 0 : index
      %313 = vector.load %arg7[%c0_136, %c0_137] : memref<8x128xf32, #tpu.memory_space<vmem>>, vector<8x128xf32>
      %c0_138 = arith.constant 0 : index
      %c0_139 = arith.constant 0 : index
      %314 = vector.load %arg5[%c0_138, %c0_139] : memref<8x128xf32, #tpu.memory_space<vmem>>, vector<8x128xf32>
      tpu.vector_store %arg5[%c0_138, %c0_139], %313 {strides = array<i32>} : memref<8x128xf32, #tpu.memory_space<vmem>>, vector<8x128xf32>,
    } else {
    }
    return
  }
  func.func @transform_0(%arg0: i32) -> (i32, i32, i32) {
    %c0_i32 = arith.constant 0 : i32
    %c0_i32_0 = arith.constant 0 : i32
    %c0_i32_1 = arith.constant 0 : i32
    return %arg0, %c0_i32, %c0_i32_0 : i32, i32, i32
  }
  func.func @transform_1(%arg0: i32) -> (i32, i32) {
    %c0_i32 = arith.constant 0 : i32
    %c0_i32_0 = arith.constant 0 : i32
    %c0_i32_1 = arith.constant 0 : i32
    return %c0_i32, %c0_i32_0 : i32, i32
  }
  func.func @transform_2(%arg0: i32) -> (i32, i32, i32) {
    %c0_i32 = arith.constant 0 : i32
    %c0_i32_0 = arith.constant 0 : i32
    %c0_i32_1 = arith.constant 0 : i32
    return %arg0, %c0_i32, %c0_i32_0 : i32, i32, i32
  }
  func.func @transform_3(%arg0: i32) -> (i32, i32) {
    %c0_i32 = arith.constant 0 : i32
    %c0_i32_0 = arith.constant 0 : i32
    %c0_i32_1 = arith.constant 0 : i32
    return %c0_i32, %c0_i32_0 : i32, i32
  }
  func.func @transform_4(%arg0: i32) -> (i32, i32) {
    %c0_i32 = arith.constant 0 : i32
    %c0_i32_0 = arith.constant 0 : i32
    %c0_i32_1 = arith.constant 0 : i32
    return %c0_i32, %c0_i32_0 : i32, i32
  }
}

</mosaic_0001>

<llo_original>
// kernel: seq_encoder2_forward.1
$region0: #{seq_encoder2_forward.1}
  #allocation0 [shape = 'u32[]', space=smem, size = 0x4, offset = 0x4, fixed_abs, tag = 'smem constant byte address 0x4 - core index']
  #allocation1 [shape = 'u32[144,128]{1,0:T(1,128)}', space=vmem, size = 0x12000, scoped, tag = 'internal scratch']
  #allocation2 [shape = 'f32[8,128]{1,0:T(8,128)}', space=vmem, size = 0x1000, scoped, tag = 'scratch operand']
  #allocation3 [shape = 'f32[8,128]{1,0:T(8,128)}', space=vmem, size = 0x1000, scoped, tag = 'scratch operand']
  %s0 = inlined_call_operand.vmem [shape: f32[8,8,512], index: 0, kind: input, shape index: {}]
  %s1 = inlined_call_operand.vmem [shape: f32[128,512], index: 1, kind: input, shape index: {}]
  %s2 = inlined_call_operand.vmem [shape: f32[8,8,128], index: 2, kind: output, shape index: {0}]
  %s3 = inlined_call_operand.vmem [shape: f32[8,128], index: 3, kind: output, shape index: {1}]
  %s4 = inlined_call_operand.vmem [shape: f32[8,128], index: 4, kind: output, shape index: {2}]
  %5 = xla_tuple %s2, %s3, %s4
  %s6 = sld [smem:[#allocation0]]
  $region42: #{seq_encoder2_forward.1} parent=0
    _
  %s8 = ssub.s32 1, %s6
  %s9 = scalar_select 0, %s8, %s6
  // Predicated region
  $region2: #{seq_encoder2_forward.1} parent=0 // pred_check
    _
  $region3: #{seq_encoder2_forward.1} parent=0 // pred_check_branch
    %11 = sbr.rel (0) target = $region5
  $region4: #{seq_encoder2_forward.1} parent=0 // pred_region
    _
  $region5: #{seq_encoder2_forward.1} parent=0 // pred_fallthru
    _
  // Predicated region
  $region6: #{seq_encoder2_forward.1} parent=0 // pred_check
    _
  $region7: #{seq_encoder2_forward.1} parent=0 // pred_check_branch
    %13 = sbr.rel (0) target = $region9
  $region8: #{seq_encoder2_forward.1} parent=0 // pred_region
    _
  $region9: #{seq_encoder2_forward.1} parent=0 // pred_fallthru
    _
  %p14 = scmp.eq.s32.totalorder 0, 0
  // Predicated region
  $region10: #{seq_encoder2_forward.1} parent=0 // pred_check
    %p15 = pneg %p14
  $region11: #{seq_encoder2_forward.1} parent=0 // pred_check_branch
    %17 = sbr.rel (%p15) target = $region13
  $region12: #{seq_encoder2_forward.1} parent=0 // pred_region
    %18 = vst [vmem:[#allocation2] sm:$0xff] 0.0
    %19 = vst [vmem:[#allocation3] sm:$0xff] 0.0
  $region13: #{seq_encoder2_forward.1} parent=0 // pred_fallthru
    _
  %v20 = vld [vmem:[%s1] sm:$0xff]
  %v21 = vld [vmem:[%s1 + $0x8] sm:$0xff]
  %v22 = vld [vmem:[%s1 + $0x10] sm:$0xff]
  %v23 = vld [vmem:[%s1 + $0x18] sm:$0xff]
  %v24 = vld [vmem:[%s1 + $0x20] sm:$0xff]
  %v25 = vld [vmem:[%s1 + $0x28] sm:$0xff]
  %v26 = vld [vmem:[%s1 + $0x30] sm:$0xff]
  %v27 = vld [vmem:[%s1 + $0x38] sm:$0xff]
  %v28 = vld [vmem:[%s1 + $0x40] sm:$0xff]
  %v29 = vld [vmem:[%s1 + $0x48] sm:$0xff]
  %v30 = vld [vmem:[%s1 + $0x50] sm:$0xff]
  %v31 = vld [vmem:[%s1 + $0x58] sm:$0xff]
  %v32 = vld [vmem:[%s1 + $0x60] sm:$0xff]
  %v33 = vld [vmem:[%s1 + $0x68] sm:$0xff]
  %v34 = vld [vmem:[%s1 + $0x70] sm:$0xff]
  %v35 = vld [vmem:[%s1 + $0x78] sm:$0xff]
  %v36 = vld [vmem:[%s1 + $0x80] sm:$0xff]
  %v37 = vld [vmem:[%s1 + $0x88] sm:$0xff]
  %v38 = vld [vmem:[%s1 + $0x90] sm:$0xff]
  %v39 = vld [vmem:[%s1 + $0x98] sm:$0xff]
  %v40 = vld [vmem:[%s1 + $0xa0] sm:$0xff]
  %v41 = vld [vmem:[%s1 + $0xa8] sm:$0xff]
  %v42 = vld [vmem:[%s1 + $0xb0] sm:$0xff]
  %v43 = vld [vmem:[%s1 + $0xb8] sm:$0xff]
  %v44 = vld [vmem:[%s1 + $0xc0] sm:$0xff]
  %v45 = vld [vmem:[%s1 + $0xc8] sm:$0xff]
  %v46 = vld [vmem:[%s1 + $0xd0] sm:$0xff]
  %v47 = vld [vmem:[%s1 + $0xd8] sm:$0xff]
  %v48 = vld [vmem:[%s1 + $0xe0] sm:$0xff]
  %v49 = vld [vmem:[%s1 + $0xe8] sm:$0xff]
  %v50 = vld [vmem:[%s1 + $0xf0] sm:$0xff]
  %v51 = vld [vmem:[%s1 + $0xf8] sm:$0xff]
  %v52 = vld [vmem:[%s1 + $0x100] sm:$0xff]
  %v53 = vld [vmem:[%s1 + $0x108] sm:$0xff]
  %v54 = vld [vmem:[%s1 + $0x110] sm:$0xff]
  %v55 = vld [vmem:[%s1 + $0x118] sm:$0xff]
  %v56 = vld [vmem:[%s1 + $0x120] sm:$0xff]
  %v57 = vld [vmem:[%s1 + $0x128] sm:$0xff]
  %v58 = vld [vmem:[%s1 + $0x130] sm:$0xff]
  %v59 = vld [vmem:[%s1 + $0x138] sm:$0xff]
  %v60 = vld [vmem:[%s1 + $0x140] sm:$0xff]
  %v61 = vld [vmem:[%s1 + $0x148] sm:$0xff]
  %v62 = vld [vmem:[%s1 + $0x150] sm:$0xff]
  %v63 = vld [vmem:[%s1 + $0x158] sm:$0xff]
  %v64 = vld [vmem:[%s1 + $0x160] sm:$0xff]
  %v65 = vld [vmem:[%s1 + $0x168] sm:$0xff]
  %v66 = vld [vmem:[%s1 + $0x170] sm:$0xff]
  %v67 = vld [vmem:[%s1 + $0x178] sm:$0xff]
  %v68 = vld [vmem:[%s1 + $0x180] sm:$0xff]
  %v69 = vld [vmem:[%s1 + $0x188] sm:$0xff]
  %v70 = vld [vmem:[%s1 + $0x190] sm:$0xff]
  %v71 = vld [vmem:[%s1 + $0x198] sm:$0xff]
  %v72 = vld [vmem:[%s1 + $0x1a0] sm:$0xff]
  %v73 = vld [vmem:[%s1 + $0x1a8] sm:$0xff]
  %v74 = vld [vmem:[%s1 + $0x1b0] sm:$0xff]
  %v75 = vld [vmem:[%s1 + $0x1b8] sm:$0xff]
  %v76 = vld [vmem:[%s1 + $0x1c0] sm:$0xff]
  %v77 = vld [vmem:[%s1 + $0x1c8] sm:$0xff]
  %v78 = vld [vmem:[%s1 + $0x1d0] sm:$0xff]
  %v79 = vld [vmem:[%s1 + $0x1d8] sm:$0xff]
  %v80 = vld [vmem:[%s1 + $0x1e0] sm:$0xff]
  %v81 = vld [vmem:[%s1 + $0x1e8] sm:$0xff]
  %v82 = vld [vmem:[%s1 + $0x1f0] sm:$0xff]
  %v83 = vld [vmem:[%s1 + $0x1f8] sm:$0xff]
  %v84 = vld [vmem:[#allocation2] sm:$0xff]
  %v85 = vld [vmem:[#allocation3] sm:$0xff]
  %v86 = vld [vmem:[%s0] sm:$0xff]
  %v87 = vld [vmem:[%s0 + $0x8] sm:$0xff]
  %v88 = vld [vmem:[%s0 + $0x10] sm:$0xff]
  %v89 = vld [vmem:[%s0 + $0x18] sm:$0xff]
  %90 = vmatprep.subr.mxu0 %v81
  %91 = vmatpush1.msra.mxu0 %v80
  %92 = vmatprep.subr.mxu0 %v77
  %93 = vmatpush1.msra.mxu0 %v76
  %94 = vmatprep.subr.mxu0 %v73
  %95 = vmatpush1.msra.mxu0 %v72
  %96 = vmatprep.subr.mxu0 %v69
  %97 = vmatpush1.msra.mxu0 %v68
  %98 = vmatprep.subr.mxu0 %v65
  %99 = vmatpush1.msra.mxu0 %v64
  %100 = vmatprep.subr.mxu0 %v61
  %101 = vmatpush1.msra.mxu0 %v60
  %102 = vmatprep.subr.mxu0 %v57
  %103 = vmatpush1.msra.mxu0 %v56
  %104 = vmatprep.subr.mxu0 %v53
  %105 = vmatpush1.msra.mxu0 %v52
  %106 = vmatprep.subr.mxu0 %v49
  %107 = vmatpush1.msra.mxu0 %v48
  %108 = vmatprep.subr.mxu0 %v45
  %109 = vmatpush1.msra.mxu0 %v44
  %110 = vmatprep.subr.mxu0 %v41
  %111 = vmatpush1.msra.mxu0 %v40
  %112 = vmatprep.subr.mxu0 %v37
  %113 = vmatpush1.msra.mxu0 %v36
  %114 = vmatprep.subr.mxu0 %v33
  %115 = vmatpush1.msra.mxu0 %v32
  %116 = vmatprep.subr.mxu0 %v29
  %117 = vmatpush1.msra.mxu0 %v28
  %118 = vmatprep.subr.mxu0 %v25
  %119 = vmatpush1.msra.mxu0 %v24
  %120 = vmatprep.subr.mxu0 %v21
  %121 = vmatpush1.msra.mxu0 %v20
  %122 = vmatprep.subr.mxu0 0.0
  %123 = vmatpush2.msra.mxu0 0.0
  %124 = vmatprep.subr.mxu0 0.0
  %125 = vmatpush2.msra.mxu0 0.0
  %126 = vmatprep.subr.mxu0 0.0
  %127 = vmatpush2.msra.mxu0 0.0
  %128 = vmatprep.subr.mxu0 0.0
  %129 = vmatpush2.msra.mxu0 0.0
  %130 = vmatprep.subr.mxu0 0.0
  %131 = vmatpush2.msra.mxu0 0.0
  %132 = vmatprep.subr.mxu0 0.0
  %133 = vmatpush2.msra.mxu0 0.0
  %134 = vmatprep.subr.mxu0 0.0
  %135 = vmatpush2.msra.mxu0 0.0
  %136 = vmatprep.subr.mxu0 0.0
  %137 = vmatpush2.msra.mxu0 0.0
  %138 = vmatprep.subr.mxu0 0.0
  %139 = vmatpush2.msra.mxu0 0.0
  %140 = vmatprep.subr.mxu0 0.0
  %141 = vmatpush2.msra.mxu0 0.0
  %142 = vmatprep.subr.mxu0 0.0
  %143 = vmatpush2.msra.mxu0 0.0
  %144 = vmatprep.subr.mxu0 0.0
  %145 = vmatpush2.msra.mxu0 0.0
  %146 = vmatprep.subr.mxu0 0.0
  %147 = vmatpush2.msra.mxu0 0.0
  %148 = vmatprep.subr.mxu0 0.0
  %149 = vmatpush2.msra.mxu0 0.0
  %150 = vmatprep.subr.mxu0 0.0
  %151 = vmatpush2.msra.mxu0 0.0
  %152 = vmatprep.subr.mxu0 0.0
  %153 = vmatpush2.msra.mxu0 0.0
  %154 = vmatprep.mubr.f32.mxu0 0.0
  %155 = vmatmul.mubr.f32.gmra.mxu0 %v84
  %v156 = vpop.f32.mrf.mxu0
  %v157 = vadd.f32 0.0, %v156
  %v158 = vpop.f32.mrf.mxu0
  %v159 = vadd.f32 0.0, %v158
  %160 = vdwg.mxu0
  %161 = vmatprep.subr.mxu0 %v83
  %162 = vmatpush1.msra.mxu0 %v82
  %163 = vmatprep.subr.mxu0 %v79
  %164 = vmatpush1.msra.mxu0 %v78
  %165 = vmatprep.subr.mxu0 %v75
  %166 = vmatpush1.msra.mxu0 %v74
  %167 = vmatprep.subr.mxu0 %v71
  %168 = vmatpush1.msra.mxu0 %v70
  %169 = vmatprep.subr.mxu0 %v67
  %170 = vmatpush1.msra.mxu0 %v66
  %171 = vmatprep.subr.mxu0 %v63
  %172 = vmatpush1.msra.mxu0 %v62
  %173 = vmatprep.subr.mxu0 %v59
  %174 = vmatpush1.msra.mxu0 %v58
  %175 = vmatprep.subr.mxu0 %v55
  %176 = vmatpush1.msra.mxu0 %v54
  %177 = vmatprep.subr.mxu0 %v51
  %178 = vmatpush1.msra.mxu0 %v50
  %179 = vmatprep.subr.mxu0 %v47
  %180 = vmatpush1.msra.mxu0 %v46
  %181 = vmatprep.subr.mxu0 %v43
  %182 = vmatpush1.msra.mxu0 %v42
  %183 = vmatprep.subr.mxu0 %v39
  %184 = vmatpush1.msra.mxu0 %v38
  %185 = vmatprep.subr.mxu0 %v35
  %186 = vmatpush1.msra.mxu0 %v34
  %187 = vmatprep.subr.mxu0 %v31
  %188 = vmatpush1.msra.mxu0 %v30
  %189 = vmatprep.subr.mxu0 %v27
  %190 = vmatpush1.msra.mxu0 %v26
  %191 = vmatprep.subr.mxu0 %v23
  %192 = vmatpush1.msra.mxu0 %v22
  %193 = vmatprep.subr.mxu0 0.0
  %194 = vmatpush2.msra.mxu0 0.0
  %195 = vmatprep.subr.mxu0 0.0
  %196 = vmatpush2.msra.mxu0 0.0
  %197 = vmatprep.subr.mxu0 0.0
  %198 = vmatpush2.msra.mxu0 0.0
  %199 = vmatprep.subr.mxu0 0.0
  %200 = vmatpush2.msra.mxu0 0.0
  %201 = vmatprep.subr.mxu0 0.0
  %202 = vmatpush2.msra.mxu0 0.0
  %203 = vmatprep.subr.mxu0 0.0
  %204 = vmatpush2.msra.mxu0 0.0
  %205 = vmatprep.subr.mxu0 0.0
  %206 = vmatpush2.msra.mxu0 0.0
  %207 = vmatprep.subr.mxu0 0.0
  %208 = vmatpush2.msra.mxu0 0.0
  %209 = vmatprep.subr.mxu0 0.0
  %210 = vmatpush2.msra.mxu0 0.0
  %211 = vmatprep.subr.mxu0 0.0
  %212 = vmatpush2.msra.mxu0 0.0
  %213 = vmatprep.subr.mxu0 0.0
  %214 = vmatpush2.msra.mxu0 0.0
  %215 = vmatprep.subr.mxu0 0.0
  %216 = vmatpush2.msra.mxu0 0.0
  %217 = vmatprep.subr.mxu0 0.0
  %218 = vmatpush2.msra.mxu0 0.0
  %219 = vmatprep.subr.mxu0 0.0
  %220 = vmatpush2.msra.mxu0 0.0
  %221 = vmatprep.subr.mxu0 0.0
  %222 = vmatpush2.msra.mxu0 0.0
  %223 = vmatprep.subr.mxu0 0.0
  %224 = vmatpush2.msra.mxu0 0.0
  %225 = vmatprep.mubr.f32.mxu0 0.0
  %226 = vmatmul.mubr.f32.gmra.mxu0 %v84
  %v227 = vpop.f32.mrf.mxu0
  %v228 = vadd.f32 0.0, %v227
  %v229 = vpop.f32.mrf.mxu0
  %v230 = vadd.f32 0.0, %v229
  %231 = vdwg.mxu0
  %v232 = vadd.f32 %v86, %v157
  %v233 = vadd.f32 %v87, %v159
  %v234 = vadd.f32 %v88, %v228
  %v235 = vadd.f32 %v89, %v230
  %v236 = vxor.u32 %v232, 2147483648
  %v237 = vmul.f32 %v236, 1.442695
  %v238 = vpow.pop %v237
  %v239 = vadd.f32 %v238, 1.0
  %v240 = vrcp.pop %v239
  %v241 = vmul.f32 1.0, %v240
  %v242 = vxor.u32 %v233, 2147483648
  %v243 = vmul.f32 %v242, 1.442695
  %v244 = vpow.pop %v243
  %v245 = vadd.f32 %v244, 1.0
  %v246 = vrcp.pop %v245
  %v247 = vmul.f32 1.0, %v246
  %v248 = vtanh.pop %v234
  %v249 = vxor.u32 %v235, 2147483648
  %v250 = vmul.f32 %v249, 1.442695
  %v251 = vpow.pop %v250
  %v252 = vadd.f32 %v251, 1.0
  %v253 = vrcp.pop %v252
  %v254 = vmul.f32 1.0, %v253
  %v255 = vmul.f32 %v247, %v85
  %v256 = vmul.f32 %v241, %v248
  %v257 = vadd.f32 %v255, %v256
  %v258 = vtanh.pop %v257
  %v259 = vmul.f32 %v254, %v258
  %260 = vst [vmem:[#allocation2] sm:$0xff] %v259
  %261 = vst [vmem:[#allocation3] sm:$0xff] %v257
  %262 = vst [vmem:[%s2] sm:$0xff] %v259
  %v263 = vld [vmem:[#allocation2] sm:$0xff]
  %v264 = vld [vmem:[#allocation3] sm:$0xff]
  %s265 = scalar_lea.vmem %s0, 32
  %v266 = vld [vmem:[%s265] sm:$0xff]
  %v267 = vld [vmem:[%s265 + $0x8] sm:$0xff]
  %v268 = vld [vmem:[%s265 + $0x10] sm:$0xff]
  %v269 = vld [vmem:[%s265 + $0x18] sm:$0xff]
  %270 = vmatprep.subr.mxu0 %v81
  %271 = vmatpush1.msra.mxu0 %v80
  %272 = vmatprep.subr.mxu0 %v77
  %273 = vmatpush1.msra.mxu0 %v76
  %274 = vmatprep.subr.mxu0 %v73
  %275 = vmatpush1.msra.mxu0 %v72
  %276 = vmatprep.subr.mxu0 %v69
  %277 = vmatpush1.msra.mxu0 %v68
  %278 = vmatprep.subr.mxu0 %v65
  %279 = vmatpush1.msra.mxu0 %v64
  %280 = vmatprep.subr.mxu0 %v61
  %281 = vmatpush1.msra.mxu0 %v60
  %282 = vmatprep.subr.mxu0 %v57
  %283 = vmatpush1.msra.mxu0 %v56
  %284 = vmatprep.subr.mxu0 %v53
  %285 = vmatpush1.msra.mxu0 %v52
  %286 = vmatprep.subr.mxu0 %v49
  %287 = vmatpush1.msra.mxu0 %v48
  %288 = vmatprep.subr.mxu0 %v45
  %289 = vmatpush1.msra.mxu0 %v44
  %290 = vmatprep.subr.mxu0 %v41
  %291 = vmatpush1.msra.mxu0 %v40
  %292 = vmatprep.subr.mxu0 %v37
  %293 = vmatpush1.msra.mxu0 %v36
  %294 = vmatprep.subr.mxu0 %v33
  %295 = vmatpush1.msra.mxu0 %v32
  %296 = vmatprep.subr.mxu0 %v29
  %297 = vmatpush1.msra.mxu0 %v28
  %298 = vmatprep.subr.mxu0 %v25
  %299 = vmatpush1.msra.mxu0 %v24
  %300 = vmatprep.subr.mxu0 %v21
  %301 = vmatpush1.msra.mxu0 %v20
  %302 = vmatprep.subr.mxu0 0.0
  %303 = vmatpush2.msra.mxu0 0.0
  %304 = vmatprep.subr.mxu0 0.0
  %305 = vmatpush2.msra.mxu0 0.0
  %306 = vmatprep.subr.mxu0 0.0
  %307 = vmatpush2.msra.mxu0 0.0
  %308 = vmatprep.subr.mxu0 0.0
  %309 = vmatpush2.msra.mxu0 0.0
  %310 = vmatprep.subr.mxu0 0.0
  %311 = vmatpush2.msra.mxu0 0.0
  %312 = vmatprep.subr.mxu0 0.0
  %313 = vmatpush2.msra.mxu0 0.0
  %314 = vmatprep.subr.mxu0 0.0
  %315 = vmatpush2.msra.mxu0 0.0
  %316 = vmatprep.subr.mxu0 0.0
  %317 = vmatpush2.msra.mxu0 0.0
  %318 = vmatprep.subr.mxu0 0.0
  %319 = vmatpush2.msra.mxu0 0.0
  %320 = vmatprep.subr.mxu0 0.0
  %321 = vmatpush2.msra.mxu0 0.0
  %322 = vmatprep.subr.mxu0 0.0
  %323 = vmatpush2.msra.mxu0 0.0
  %324 = vmatprep.subr.mxu0 0.0
  %325 = vmatpush2.msra.mxu0 0.0
  %326 = vmatprep.subr.mxu0 0.0
  %327 = vmatpush2.msra.mxu0 0.0
  %328 = vmatprep.subr.mxu0 0.0
  %329 = vmatpush2.msra.mxu0 0.0
  %330 = vmatprep.subr.mxu0 0.0
  %331 = vmatpush2.msra.mxu0 0.0
  %332 = vmatprep.subr.mxu0 0.0
  %333 = vmatpush2.msra.mxu0 0.0
  %334 = vmatprep.mubr.f32.mxu0 0.0
  %335 = vmatmul.mubr.f32.gmra.mxu0 %v263
  %v336 = vpop.f32.mrf.mxu0
  %v337 = vadd.f32 0.0, %v336
  %v338 = vpop.f32.mrf.mxu0
  %v339 = vadd.f32 0.0, %v338
  %340 = vdwg.mxu0
  %341 = vmatprep.subr.mxu0 %v83
  %342 = vmatpush1.msra.mxu0 %v82
  %343 = vmatprep.subr.mxu0 %v79
  %344 = vmatpush1.msra.mxu0 %v78
  %345 = vmatprep.subr.mxu0 %v75
  %346 = vmatpush1.msra.mxu0 %v74
  %347 = vmatprep.subr.mxu0 %v71
  %348 = vmatpush1.msra.mxu0 %v70
  %349 = vmatprep.subr.mxu0 %v67
  %350 = vmatpush1.msra.mxu0 %v66
  %351 = vmatprep.subr.mxu0 %v63
  %352 = vmatpush1.msra.mxu0 %v62
  %353 = vmatprep.subr.mxu0 %v59
  %354 = vmatpush1.msra.mxu0 %v58
  %355 = vmatprep.subr.mxu0 %v55
  %356 = vmatpush1.msra.mxu0 %v54
  %357 = vmatprep.subr.mxu0 %v51
  %358 = vmatpush1.msra.mxu0 %v50
  %359 = vmatprep.subr.mxu0 %v47
  %360 = vmatpush1.msra.mxu0 %v46
  %361 = vmatprep.subr.mxu0 %v43
  %362 = vmatpush1.msra.mxu0 %v42
  %363 = vmatprep.subr.mxu0 %v39
  %364 = vmatpush1.msra.mxu0 %v38
  %365 = vmatprep.subr.mxu0 %v35
  %366 = vmatpush1.msra.mxu0 %v34
  %367 = vmatprep.subr.mxu0 %v31
  %368 = vmatpush1.msra.mxu0 %v30
  %369 = vmatprep.subr.mxu0 %v27
  %370 = vmatpush1.msra.mxu0 %v26
  %371 = vmatprep.subr.mxu0 %v23
  %372 = vmatpush1.msra.mxu0 %v22
  %373 = vmatprep.subr.mxu0 0.0
  %374 = vmatpush2.msra.mxu0 0.0
  %375 = vmatprep.subr.mxu0 0.0
  %376 = vmatpush2.msra.mxu0 0.0
  %377 = vmatprep.subr.mxu0 0.0
  %378 = vmatpush2.msra.mxu0 0.0
  %379 = vmatprep.subr.mxu0 0.0
  %380 = vmatpush2.msra.mxu0 0.0
  %381 = vmatprep.subr.mxu0 0.0
  %382 = vmatpush2.msra.mxu0 0.0
  %383 = vmatprep.subr.mxu0 0.0
  %384 = vmatpush2.msra.mxu0 0.0
  %385 = vmatprep.subr.mxu0 0.0
  %386 = vmatpush2.msra.mxu0 0.0
  %387 = vmatprep.subr.mxu0 0.0
  %388 = vmatpush2.msra.mxu0 0.0
  %389 = vmatprep.subr.mxu0 0.0
  %390 = vmatpush2.msra.mxu0 0.0
  %391 = vmatprep.subr.mxu0 0.0
  %392 = vmatpush2.msra.mxu0 0.0
  %393 = vmatprep.subr.mxu0 0.0
  %394 = vmatpush2.msra.mxu0 0.0
  %395 = vmatprep.subr.mxu0 0.0
  %396 = vmatpush2.msra.mxu0 0.0
  %397 = vmatprep.subr.mxu0 0.0
  %398 = vmatpush2.msra.mxu0 0.0
  %399 = vmatprep.subr.mxu0 0.0
  %400 = vmatpush2.msra.mxu0 0.0
  %401 = vmatprep.subr.mxu0 0.0
  %402 = vmatpush2.msra.mxu0 0.0
  %403 = vmatprep.subr.mxu0 0.0
  %404 = vmatpush2.msra.mxu0 0.0
  %405 = vmatprep.mubr.f32.mxu0 0.0
  %406 = vmatmul.mubr.f32.gmra.mxu0 %v263
  %v407 = vpop.f32.mrf.mxu0
  %v408 = vadd.f32 0.0, %v407
  %v409 = vpop.f32.mrf.mxu0
  %v410 = vadd.f32 0.0, %v409
  %411 = vdwg.mxu0
  %v412 = vadd.f32 %v266, %v337
  %v413 = vadd.f32 %v267, %v339
  %v414 = vadd.f32 %v268, %v408
  %v415 = vadd.f32 %v269, %v410
  %v416 = vxor.u32 %v412, 2147483648
  %v417 = vmul.f32 %v416, 1.442695
  %v418 = vpow.pop %v417
  %v419 = vadd.f32 %v418, 1.0
  %v420 = vrcp.pop %v419
  %v421 = vmul.f32 1.0, %v420
  %v422 = vxor.u32 %v413, 2147483648
  %v423 = vmul.f32 %v422, 1.442695
  %v424 = vpow.pop %v423
  %v425 = vadd.f32 %v424, 1.0
  %v426 = vrcp.pop %v425
  %v427 = vmul.f32 1.0, %v426
  %v428 = vtanh.pop %v414
  %v429 = vxor.u32 %v415, 2147483648
  %v430 = vmul.f32 %v429, 1.442695
  %v431 = vpow.pop %v430
  %v432 = vadd.f32 %v431, 1.0
  %v433 = vrcp.pop %v432
  %v434 = vmul.f32 1.0, %v433
  %v435 = vmul.f32 %v427, %v264
  %v436 = vmul.f32 %v421, %v428
  %v437 = vadd.f32 %v435, %v436
  %v438 = vtanh.pop %v437
  %v439 = vmul.f32 %v434, %v438
  %440 = vst [vmem:[#allocation2] sm:$0xff] %v439
  %441 = vst [vmem:[#allocation3] sm:$0xff] %v437
  %s442 = scalar_lea.vmem %s2, 8
  %443 = vst [vmem:[%s442] sm:$0xff] %v439
  %v444 = vld [vmem:[#allocation2] sm:$0xff]
  %v445 = vld [vmem:[#allocation3] sm:$0xff]
  %s446 = scalar_lea.vmem %s0, 64
  %v447 = vld [vmem:[%s446] sm:$0xff]
  %v448 = vld [vmem:[%s446 + $0x8] sm:$0xff]
  %v449 = vld [vmem:[%s446 + $0x10] sm:$0xff]
  %v450 = vld [vmem:[%s446 + $0x18] sm:$0xff]
  %451 = vmatprep.subr.mxu0 %v81
  %452 = vmatpush1.msra.mxu0 %v80
  %453 = vmatprep.subr.mxu0 %v77
  %454 = vmatpush1.msra.mxu0 %v76
  %455 = vmatprep.subr.mxu0 %v73
  %456 = vmatpush1.msra.mxu0 %v72
  %457 = vmatprep.subr.mxu0 %v69
  %458 = vmatpush1.msra.mxu0 %v68
  %459 = vmatprep.subr.mxu0 %v65
  %460 = vmatpush1.msra.mxu0 %v64
  %461 = vmatprep.subr.mxu0 %v61
  %462 = vmatpush1.msra.mxu0 %v60
  %463 = vmatprep.subr.mxu0 %v57
  %464 = vmatpush1.msra.mxu0 %v56
  %465 = vmatprep.subr.mxu0 %v53
  %466 = vmatpush1.msra.mxu0 %v52
  %467 = vmatprep.subr.mxu0 %v49
  %468 = vmatpush1.msra.mxu0 %v48
  %469 = vmatprep.subr.mxu0 %v45
  %470 = vmatpush1.msra.mxu0 %v44
  %471 = vmatprep.subr.mxu0 %v41
  %472 = vmatpush1.msra.mxu0 %v40
  %473 = vmatprep.subr.mxu0 %v37
  %474 = vmatpush1.msra.mxu0 %v36
  %475 = vmatprep.subr.mxu0 %v33
  %476 = vmatpush1.msra.mxu0 %v32
  %477 = vmatprep.subr.mxu0 %v29
  %478 = vmatpush1.msra.mxu0 %v28
  %479 = vmatprep.subr.mxu0 %v25
  %480 = vmatpush1.msra.mxu0 %v24
  %481 = vmatprep.subr.mxu0 %v21
  %482 = vmatpush1.msra.mxu0 %v20
  %483 = vmatprep.subr.mxu0 0.0
  %484 = vmatpush2.msra.mxu0 0.0
  %485 = vmatprep.subr.mxu0 0.0
  %486 = vmatpush2.msra.mxu0 0.0
  %487 = vmatprep.subr.mxu0 0.0
  %488 = vmatpush2.msra.mxu0 0.0
  %489 = vmatprep.subr.mxu0 0.0
  %490 = vmatpush2.msra.mxu0 0.0
  %491 = vmatprep.subr.mxu0 0.0
  %492 = vmatpush2.msra.mxu0 0.0
  %493 = vmatprep.subr.mxu0 0.0
  %494 = vmatpush2.msra.mxu0 0.0
  %495 = vmatprep.subr.mxu0 0.0
  %496 = vmatpush2.msra.mxu0 0.0
  %497 = vmatprep.subr.mxu0 0.0
  %498 = vmatpush2.msra.mxu0 0.0
  %499 = vmatprep.subr.mxu0 0.0
  %500 = vmatpush2.msra.mxu0 0.0
  %501 = vmatprep.subr.mxu0 0.0
  %502 = vmatpush2.msra.mxu0 0.0
  %503 = vmatprep.subr.mxu0 0.0
  %504 = vmatpush2.msra.mxu0 0.0
  %505 = vmatprep.subr.mxu0 0.0
  %506 = vmatpush2.msra.mxu0 0.0
  %507 = vmatprep.subr.mxu0 0.0
  %508 = vmatpush2.msra.mxu0 0.0
  %509 = vmatprep.subr.mxu0 0.0
  %510 = vmatpush2.msra.mxu0 0.0
  %511 = vmatprep.subr.mxu0 0.0
  %512 = vmatpush2.msra.mxu0 0.0
  %513 = vmatprep.subr.mxu0 0.0
  %514 = vmatpush2.msra.mxu0 0.0
  %515 = vmatprep.mubr.f32.mxu0 0.0
  %516 = vmatmul.mubr.f32.gmra.mxu0 %v444
  %v517 = vpop.f32.mrf.mxu0
  %v518 = vadd.f32 0.0, %v517
  %v519 = vpop.f32.mrf.mxu0
  %v520 = vadd.f32 0.0, %v519
  %521 = vdwg.mxu0
  %522 = vmatprep.subr.mxu0 %v83
  %523 = vmatpush1.msra.mxu0 %v82
  %524 = vmatprep.subr.mxu0 %v79
  %525 = vmatpush1.msra.mxu0 %v78
  %526 = vmatprep.subr.mxu0 %v75
  %527 = vmatpush1.msra.mxu0 %v74
  %528 = vmatprep.subr.mxu0 %v71
  %529 = vmatpush1.msra.mxu0 %v70
  %530 = vmatprep.subr.mxu0 %v67
  %531 = vmatpush1.msra.mxu0 %v66
  %532 = vmatprep.subr.mxu0 %v63
  %533 = vmatpush1.msra.mxu0 %v62
  %534 = vmatprep.subr.mxu0 %v59
  %535 = vmatpush1.msra.mxu0 %v58
  %536 = vmatprep.subr.mxu0 %v55
  %537 = vmatpush1.msra.mxu0 %v54
  %538 = vmatprep.subr.mxu0 %v51
  %539 = vmatpush1.msra.mxu0 %v50
  %540 = vmatprep.subr.mxu0 %v47
  %541 = vmatpush1.msra.mxu0 %v46
  %542 = vmatprep.subr.mxu0 %v43
  %543 = vmatpush1.msra.mxu0 %v42
  %544 = vmatprep.subr.mxu0 %v39
  %545 = vmatpush1.msra.mxu0 %v38
  %546 = vmatprep.subr.mxu0 %v35
  %547 = vmatpush1.msra.mxu0 %v34
  %548 = vmatprep.subr.mxu0 %v31
  %549 = vmatpush1.msra.mxu0 %v30
  %550 = vmatprep.subr.mxu0 %v27
  %551 = vmatpush1.msra.mxu0 %v26
  %552 = vmatprep.subr.mxu0 %v23
  %553 = vmatpush1.msra.mxu0 %v22
  %554 = vmatprep.subr.mxu0 0.0
  %555 = vmatpush2.msra.mxu0 0.0
  %556 = vmatprep.subr.mxu0 0.0
  %557 = vmatpush2.msra.mxu0 0.0
  %558 = vmatprep.subr.mxu0 0.0
  %559 = vmatpush2.msra.mxu0 0.0
  %560 = vmatprep.subr.mxu0 0.0
  %561 = vmatpush2.msra.mxu0 0.0
  %562 = vmatprep.subr.mxu0 0.0
  %563 = vmatpush2.msra.mxu0 0.0
  %564 = vmatprep.subr.mxu0 0.0
  %565 = vmatpush2.msra.mxu0 0.0
  %566 = vmatprep.subr.mxu0 0.0
  %567 = vmatpush2.msra.mxu0 0.0
  %568 = vmatprep.subr.mxu0 0.0
  %569 = vmatpush2.msra.mxu0 0.0
  %570 = vmatprep.subr.mxu0 0.0
  %571 = vmatpush2.msra.mxu0 0.0
  %572 = vmatprep.subr.mxu0 0.0
  %573 = vmatpush2.msra.mxu0 0.0
  %574 = vmatprep.subr.mxu0 0.0
  %575 = vmatpush2.msra.mxu0 0.0
  %576 = vmatprep.subr.mxu0 0.0
  %577 = vmatpush2.msra.mxu0 0.0
  %578 = vmatprep.subr.mxu0 0.0
  %579 = vmatpush2.msra.mxu0 0.0
  %580 = vmatprep.subr.mxu0 0.0
  %581 = vmatpush2.msra.mxu0 0.0
  %582 = vmatprep.subr.mxu0 0.0
  %583 = vmatpush2.msra.mxu0 0.0
  %584 = vmatprep.subr.mxu0 0.0
  %585 = vmatpush2.msra.mxu0 0.0
  %586 = vmatprep.mubr.f32.mxu0 0.0
  %587 = vmatmul.mubr.f32.gmra.mxu0 %v444
  %v588 = vpop.f32.mrf.mxu0
  %v589 = vadd.f32 0.0, %v588
  %v590 = vpop.f32.mrf.mxu0
  %v591 = vadd.f32 0.0, %v590
  %592 = vdwg.mxu0
  %v593 = vadd.f32 %v447, %v518
  %v594 = vadd.f32 %v448, %v520
  %v595 = vadd.f32 %v449, %v589
  %v596 = vadd.f32 %v450, %v591
  %v597 = vxor.u32 %v593, 2147483648
  %v598 = vmul.f32 %v597, 1.442695
  %v599 = vpow.pop %v598
  %v600 = vadd.f32 %v599, 1.0
  %v601 = vrcp.pop %v600
  %v602 = vmul.f32 1.0, %v601
  %v603 = vxor.u32 %v594, 2147483648
  %v604 = vmul.f32 %v603, 1.442695
  %v605 = vpow.pop %v604
  %v606 = vadd.f32 %v605, 1.0
  %v607 = vrcp.pop %v606
  %v608 = vmul.f32 1.0, %v607
  %v609 = vtanh.pop %v595
  %v610 = vxor.u32 %v596, 2147483648
  %v611 = vmul.f32 %v610, 1.442695
  %v612 = vpow.pop %v611
  %v613 = vadd.f32 %v612, 1.0
  %v614 = vrcp.pop %v613
  %v615 = vmul.f32 1.0, %v614
  %v616 = vmul.f32 %v608, %v445
  %v617 = vmul.f32 %v602, %v609
  %v618 = vadd.f32 %v616, %v617
  %v619 = vtanh.pop %v618
  %v620 = vmul.f32 %v615, %v619
  %621 = vst [vmem:[#allocation2] sm:$0xff] %v620
  %622 = vst [vmem:[#allocation3] sm:$0xff] %v618
  %s623 = scalar_lea.vmem %s2, 16
  %624 = vst [vmem:[%s623] sm:$0xff] %v620
  %v625 = vld [vmem:[#allocation2] sm:$0xff]
  %v626 = vld [vmem:[#allocation3] sm:$0xff]
  %s627 = scalar_lea.vmem %s0, 96
  %v628 = vld [vmem:[%s627] sm:$0xff]
  %v629 = vld [vmem:[%s627 + $0x8] sm:$0xff]
  %v630 = vld [vmem:[%s627 + $0x10] sm:$0xff]
  %v631 = vld [vmem:[%s627 + $0x18] sm:$0xff]
  %632 = vmatprep.subr.mxu0 %v81
  %633 = vmatpush1.msra.mxu0 %v80
  %634 = vmatprep.subr.mxu0 %v77
  %635 = vmatpush1.msra.mxu0 %v76
  %636 = vmatprep.subr.mxu0 %v73
  %637 = vmatpush1.msra.mxu0 %v72
  %638 = vmatprep.subr.mxu0 %v69
  %639 = vmatpush1.msra.mxu0 %v68
  %640 = vmatprep.subr.mxu0 %v65
  %641 = vmatpush1.msra.mxu0 %v64
  %642 = vmatprep.subr.mxu0 %v61
  %643 = vmatpush1.msra.mxu0 %v60
  %644 = vmatprep.subr.mxu0 %v57
  %645 = vmatpush1.msra.mxu0 %v56
  %646 = vmatprep.subr.mxu0 %v53
  %647 = vmatpush1.msra.mxu0 %v52
  %648 = vmatprep.subr.mxu0 %v49
  %649 = vmatpush1.msra.mxu0 %v48
  %650 = vmatprep.subr.mxu0 %v45
  %651 = vmatpush1.msra.mxu0 %v44
  %652 = vmatprep.subr.mxu0 %v41
  %653 = vmatpush1.msra.mxu0 %v40
  %654 = vmatprep.subr.mxu0 %v37
  %655 = vmatpush1.msra.mxu0 %v36
  %656 = vmatprep.subr.mxu0 %v33
  %657 = vmatpush1.msra.mxu0 %v32
  %658 = vmatprep.subr.mxu0 %v29
  %659 = vmatpush1.msra.mxu0 %v28
  %660 = vmatprep.subr.mxu0 %v25
  %661 = vmatpush1.msra.mxu0 %v24
  %662 = vmatprep.subr.mxu0 %v21
  %663 = vmatpush1.msra.mxu0 %v20
  %664 = vmatprep.subr.mxu0 0.0
  %665 = vmatpush2.msra.mxu0 0.0
  %666 = vmatprep.subr.mxu0 0.0
  %667 = vmatpush2.msra.mxu0 0.0
  %668 = vmatprep.subr.mxu0 0.0
  %669 = vmatpush2.msra.mxu0 0.0
  %670 = vmatprep.subr.mxu0 0.0
  %671 = vmatpush2.msra.mxu0 0.0
  %672 = vmatprep.subr.mxu0 0.0
  %673 = vmatpush2.msra.mxu0 0.0
  %674 = vmatprep.subr.mxu0 0.0
  %675 = vmatpush2.msra.mxu0 0.0
  %676 = vmatprep.subr.mxu0 0.0
  %677 = vmatpush2.msra.mxu0 0.0
  %678 = vmatprep.subr.mxu0 0.0
  %679 = vmatpush2.msra.mxu0 0.0
  %680 = vmatprep.subr.mxu0 0.0
  %681 = vmatpush2.msra.mxu0 0.0
  %682 = vmatprep.subr.mxu0 0.0
  %683 = vmatpush2.msra.mxu0 0.0
  %684 = vmatprep.subr.mxu0 0.0
  %685 = vmatpush2.msra.mxu0 0.0
  %686 = vmatprep.subr.mxu0 0.0
  %687 = vmatpush2.msra.mxu0 0.0
  %688 = vmatprep.subr.mxu0 0.0
  %689 = vmatpush2.msra.mxu0 0.0
  %690 = vmatprep.subr.mxu0 0.0
  %691 = vmatpush2.msra.mxu0 0.0
  %692 = vmatprep.subr.mxu0 0.0
  %693 = vmatpush2.msra.mxu0 0.0
  %694 = vmatprep.subr.mxu0 0.0
  %695 = vmatpush2.msra.mxu0 0.0
  %696 = vmatprep.mubr.f32.mxu0 0.0
  %697 = vmatmul.mubr.f32.gmra.mxu0 %v625
  %v698 = vpop.f32.mrf.mxu0
  %v699 = vadd.f32 0.0, %v698
  %v700 = vpop.f32.mrf.mxu0
  %v701 = vadd.f32 0.0, %v700
  %702 = vdwg.mxu0
  %703 = vmatprep.subr.mxu0 %v83
  %704 = vmatpush1.msra.mxu0 %v82
  %705 = vmatprep.subr.mxu0 %v79
  %706 = vmatpush1.msra.mxu0 %v78
  %707 = vmatprep.subr.mxu0 %v75
  %708 = vmatpush1.msra.mxu0 %v74
  %709 = vmatprep.subr.mxu0 %v71
  %710 = vmatpush1.msra.mxu0 %v70
  %711 = vmatprep.subr.mxu0 %v67
  %712 = vmatpush1.msra.mxu0 %v66
  %713 = vmatprep.subr.mxu0 %v63
  %714 = vmatpush1.msra.mxu0 %v62
  %715 = vmatprep.subr.mxu0 %v59
  %716 = vmatpush1.msra.mxu0 %v58
  %717 = vmatprep.subr.mxu0 %v55
  %718 = vmatpush1.msra.mxu0 %v54
  %719 = vmatprep.subr.mxu0 %v51
  %720 = vmatpush1.msra.mxu0 %v50
  %721 = vmatprep.subr.mxu0 %v47
  %722 = vmatpush1.msra.mxu0 %v46
  %723 = vmatprep.subr.mxu0 %v43
  %724 = vmatpush1.msra.mxu0 %v42
  %725 = vmatprep.subr.mxu0 %v39
  %726 = vmatpush1.msra.mxu0 %v38
  %727 = vmatprep.subr.mxu0 %v35
  %728 = vmatpush1.msra.mxu0 %v34
  %729 = vmatprep.subr.mxu0 %v31
  %730 = vmatpush1.msra.mxu0 %v30
  %731 = vmatprep.subr.mxu0 %v27
  %732 = vmatpush1.msra.mxu0 %v26
  %733 = vmatprep.subr.mxu0 %v23
  %734 = vmatpush1.msra.mxu0 %v22
  %735 = vmatprep.subr.mxu0 0.0
  %736 = vmatpush2.msra.mxu0 0.0
  %737 = vmatprep.subr.mxu0 0.0
  %738 = vmatpush2.msra.mxu0 0.0
  %739 = vmatprep.subr.mxu0 0.0
  %740 = vmatpush2.msra.mxu0 0.0
  %741 = vmatprep.subr.mxu0 0.0
  %742 = vmatpush2.msra.mxu0 0.0
  %743 = vmatprep.subr.mxu0 0.0
  %744 = vmatpush2.msra.mxu0 0.0
  %745 = vmatprep.subr.mxu0 0.0
  %746 = vmatpush2.msra.mxu0 0.0
  %747 = vmatprep.subr.mxu0 0.0
  %748 = vmatpush2.msra.mxu0 0.0
  %749 = vmatprep.subr.mxu0 0.0
  %750 = vmatpush2.msra.mxu0 0.0
  %751 = vmatprep.subr.mxu0 0.0
  %752 = vmatpush2.msra.mxu0 0.0
  %753 = vmatprep.subr.mxu0 0.0
  %754 = vmatpush2.msra.mxu0 0.0
  %755 = vmatprep.subr.mxu0 0.0
  %756 = vmatpush2.msra.mxu0 0.0
  %757 = vmatprep.subr.mxu0 0.0
  %758 = vmatpush2.msra.mxu0 0.0
  %759 = vmatprep.subr.mxu0 0.0
  %760 = vmatpush2.msra.mxu0 0.0
  %761 = vmatprep.subr.mxu0 0.0
  %762 = vmatpush2.msra.mxu0 0.0
  %763 = vmatprep.subr.mxu0 0.0
  %764 = vmatpush2.msra.mxu0 0.0
  %765 = vmatprep.subr.mxu0 0.0
  %766 = vmatpush2.msra.mxu0 0.0
  %767 = vmatprep.mubr.f32.mxu0 0.0
  %768 = vmatmul.mubr.f32.gmra.mxu0 %v625
  %v769 = vpop.f32.mrf.mxu0
  %v770 = vadd.f32 0.0, %v769
  %v771 = vpop.f32.mrf.mxu0
  %v772 = vadd.f32 0.0, %v771
  %773 = vdwg.mxu0
  %v774 = vadd.f32 %v628, %v699
  %v775 = vadd.f32 %v629, %v701
  %v776 = vadd.f32 %v630, %v770
  %v777 = vadd.f32 %v631, %v772
  %v778 = vxor.u32 %v774, 2147483648
  %v779 = vmul.f32 %v778, 1.442695
  %v780 = vpow.pop %v779
  %v781 = vadd.f32 %v780, 1.0
  %v782 = vrcp.pop %v781
  %v783 = vmul.f32 1.0, %v782
  %v784 = vxor.u32 %v775, 2147483648
  %v785 = vmul.f32 %v784, 1.442695
  %v786 = vpow.pop %v785
  %v787 = vadd.f32 %v786, 1.0
  %v788 = vrcp.pop %v787
  %v789 = vmul.f32 1.0, %v788
  %v790 = vtanh.pop %v776
  %v791 = vxor.u32 %v777, 2147483648
  %v792 = vmul.f32 %v791, 1.442695
  %v793 = vpow.pop %v792
  %v794 = vadd.f32 %v793, 1.0
  %v795 = vrcp.pop %v794
  %v796 = vmul.f32 1.0, %v795
  %v797 = vmul.f32 %v789, %v626
  %v798 = vmul.f32 %v783, %v790
  %v799 = vadd.f32 %v797, %v798
  %v800 = vtanh.pop %v799
  %v801 = vmul.f32 %v796, %v800
  %802 = vst [vmem:[#allocation2] sm:$0xff] %v801
  %803 = vst [vmem:[#allocation3] sm:$0xff] %v799
  %s804 = scalar_lea.vmem %s2, 24
  %805 = vst [vmem:[%s804] sm:$0xff] %v801
  %v806 = vld [vmem:[#allocation2] sm:$0xff]
  %v807 = vld [vmem:[#allocation3] sm:$0xff]
  %s808 = scalar_lea.vmem %s0, 128
  %v809 = vld [vmem:[%s808] sm:$0xff]
  %v810 = vld [vmem:[%s808 + $0x8] sm:$0xff]
  %v811 = vld [vmem:[%s808 + $0x10] sm:$0xff]
  %v812 = vld [vmem:[%s808 + $0x18] sm:$0xff]
  %813 = vmatprep.subr.mxu0 %v81
  %814 = vmatpush1.msra.mxu0 %v80
  %815 = vmatprep.subr.mxu0 %v77
  %816 = vmatpush1.msra.mxu0 %v76
  %817 = vmatprep.subr.mxu0 %v73
  %818 = vmatpush1.msra.mxu0 %v72
  %819 = vmatprep.subr.mxu0 %v69
  %820 = vmatpush1.msra.mxu0 %v68
  %821 = vmatprep.subr.mxu0 %v65
  %822 = vmatpush1.msra.mxu0 %v64
  %823 = vmatprep.subr.mxu0 %v61
  %824 = vmatpush1.msra.mxu0 %v60
  %825 = vmatprep.subr.mxu0 %v57
  %826 = vmatpush1.msra.mxu0 %v56
  %827 = vmatprep.subr.mxu0 %v53
  %828 = vmatpush1.msra.mxu0 %v52
  %829 = vmatprep.subr.mxu0 %v49
  %830 = vmatpush1.msra.mxu0 %v48
  %831 = vmatprep.subr.mxu0 %v45
  %832 = vmatpush1.msra.mxu0 %v44
  %833 = vmatprep.subr.mxu0 %v41
  %834 = vmatpush1.msra.mxu0 %v40
  %835 = vmatprep.subr.mxu0 %v37
  %836 = vmatpush1.msra.mxu0 %v36
  %837 = vmatprep.subr.mxu0 %v33
  %838 = vmatpush1.msra.mxu0 %v32
  %839 = vmatprep.subr.mxu0 %v29
  %840 = vmatpush1.msra.mxu0 %v28
  %841 = vmatprep.subr.mxu0 %v25
  %842 = vmatpush1.msra.mxu0 %v24
  %843 = vmatprep.subr.mxu0 %v21
  %844 = vmatpush1.msra.mxu0 %v20
  %845 = vmatprep.subr.mxu0 0.0
  %846 = vmatpush2.msra.mxu0 0.0
  %847 = vmatprep.subr.mxu0 0.0
  %848 = vmatpush2.msra.mxu0 0.0
  %849 = vmatprep.subr.mxu0 0.0
  %850 = vmatpush2.msra.mxu0 0.0
  %851 = vmatprep.subr.mxu0 0.0
  %852 = vmatpush2.msra.mxu0 0.0
  %853 = vmatprep.subr.mxu0 0.0
  %854 = vmatpush2.msra.mxu0 0.0
  %855 = vmatprep.subr.mxu0 0.0
  %856 = vmatpush2.msra.mxu0 0.0
  %857 = vmatprep.subr.mxu0 0.0
  %858 = vmatpush2.msra.mxu0 0.0
  %859 = vmatprep.subr.mxu0 0.0
  %860 = vmatpush2.msra.mxu0 0.0
  %861 = vmatprep.subr.mxu0 0.0
  %862 = vmatpush2.msra.mxu0 0.0
  %863 = vmatprep.subr.mxu0 0.0
  %864 = vmatpush2.msra.mxu0 0.0
  %865 = vmatprep.subr.mxu0 0.0
  %866 = vmatpush2.msra.mxu0 0.0
  %867 = vmatprep.subr.mxu0 0.0
  %868 = vmatpush2.msra.mxu0 0.0
  %869 = vmatprep.subr.mxu0 0.0
  %870 = vmatpush2.msra.mxu0 0.0
  %871 = vmatprep.subr.mxu0 0.0
  %872 = vmatpush2.msra.mxu0 0.0
  %873 = vmatprep.subr.mxu0 0.0
  %874 = vmatpush2.msra.mxu0 0.0
  %875 = vmatprep.subr.mxu0 0.0
  %876 = vmatpush2.msra.mxu0 0.0
  %877 = vmatprep.mubr.f32.mxu0 0.0
  %878 = vmatmul.mubr.f32.gmra.mxu0 %v806
  %v879 = vpop.f32.mrf.mxu0
  %v880 = vadd.f32 0.0, %v879
  %v881 = vpop.f32.mrf.mxu0
  %v882 = vadd.f32 0.0, %v881
  %883 = vdwg.mxu0
  %884 = vmatprep.subr.mxu0 %v83
  %885 = vmatpush1.msra.mxu0 %v82
  %886 = vmatprep.subr.mxu0 %v79
  %887 = vmatpush1.msra.mxu0 %v78
  %888 = vmatprep.subr.mxu0 %v75
  %889 = vmatpush1.msra.mxu0 %v74
  %890 = vmatprep.subr.mxu0 %v71
  %891 = vmatpush1.msra.mxu0 %v70
  %892 = vmatprep.subr.mxu0 %v67
  %893 = vmatpush1.msra.mxu0 %v66
  %894 = vmatprep.subr.mxu0 %v63
  %895 = vmatpush1.msra.mxu0 %v62
  %896 = vmatprep.subr.mxu0 %v59
  %897 = vmatpush1.msra.mxu0 %v58
  %898 = vmatprep.subr.mxu0 %v55
  %899 = vmatpush1.msra.mxu0 %v54
  %900 = vmatprep.subr.mxu0 %v51
  %901 = vmatpush1.msra.mxu0 %v50
  %902 = vmatprep.subr.mxu0 %v47
  %903 = vmatpush1.msra.mxu0 %v46
  %904 = vmatprep.subr.mxu0 %v43
  %905 = vmatpush1.msra.mxu0 %v42
  %906 = vmatprep.subr.mxu0 %v39
  %907 = vmatpush1.msra.mxu0 %v38
  %908 = vmatprep.subr.mxu0 %v35
  %909 = vmatpush1.msra.mxu0 %v34
  %910 = vmatprep.subr.mxu0 %v31
  %911 = vmatpush1.msra.mxu0 %v30
  %912 = vmatprep.subr.mxu0 %v27
  %913 = vmatpush1.msra.mxu0 %v26
  %914 = vmatprep.subr.mxu0 %v23
  %915 = vmatpush1.msra.mxu0 %v22
  %916 = vmatprep.subr.mxu0 0.0
  %917 = vmatpush2.msra.mxu0 0.0
  %918 = vmatprep.subr.mxu0 0.0
  %919 = vmatpush2.msra.mxu0 0.0
  %920 = vmatprep.subr.mxu0 0.0
  %921 = vmatpush2.msra.mxu0 0.0
  %922 = vmatprep.subr.mxu0 0.0
  %923 = vmatpush2.msra.mxu0 0.0
  %924 = vmatprep.subr.mxu0 0.0
  %925 = vmatpush2.msra.mxu0 0.0
  %926 = vmatprep.subr.mxu0 0.0
  %927 = vmatpush2.msra.mxu0 0.0
  %928 = vmatprep.subr.mxu0 0.0
  %929 = vmatpush2.msra.mxu0 0.0
  %930 = vmatprep.subr.mxu0 0.0
  %931 = vmatpush2.msra.mxu0 0.0
  %932 = vmatprep.subr.mxu0 0.0
  %933 = vmatpush2.msra.mxu0 0.0
  %934 = vmatprep.subr.mxu0 0.0
  %935 = vmatpush2.msra.mxu0 0.0
  %936 = vmatprep.subr.mxu0 0.0
  %937 = vmatpush2.msra.mxu0 0.0
  %938 = vmatprep.subr.mxu0 0.0
  %939 = vmatpush2.msra.mxu0 0.0
  %940 = vmatprep.subr.mxu0 0.0
  %941 = vmatpush2.msra.mxu0 0.0
  %942 = vmatprep.subr.mxu0 0.0
  %943 = vmatpush2.msra.mxu0 0.0
  %944 = vmatprep.subr.mxu0 0.0
  %945 = vmatpush2.msra.mxu0 0.0
  %946 = vmatprep.subr.mxu0 0.0
  %947 = vmatpush2.msra.mxu0 0.0
  %948 = vmatprep.mubr.f32.mxu0 0.0
  %949 = vmatmul.mubr.f32.gmra.mxu0 %v806
  %v950 = vpop.f32.mrf.mxu0
  %v951 = vadd.f32 0.0, %v950
  %v952 = vpop.f32.mrf.mxu0
  %v953 = vadd.f32 0.0, %v952
  %954 = vdwg.mxu0
  %v955 = vadd.f32 %v809, %v880
  %v956 = vadd.f32 %v810, %v882
  %v957 = vadd.f32 %v811, %v951
  %v958 = vadd.f32 %v812, %v953
  %v959 = vxor.u32 %v955, 2147483648
  %v960 = vmul.f32 %v959, 1.442695
  %v961 = vpow.pop %v960
  %v962 = vadd.f32 %v961, 1.0
  %v963 = vrcp.pop %v962
  %v964 = vmul.f32 1.0, %v963
  %v965 = vxor.u32 %v956, 2147483648
  %v966 = vmul.f32 %v965, 1.442695
  %v967 = vpow.pop %v966
  %v968 = vadd.f32 %v967, 1.0
  %v969 = vrcp.pop %v968
  %v970 = vmul.f32 1.0, %v969
  %v971 = vtanh.pop %v957
  %v972 = vxor.u32 %v958, 2147483648
  %v973 = vmul.f32 %v972, 1.442695
  %v974 = vpow.pop %v973
  %v975 = vadd.f32 %v974, 1.0
  %v976 = vrcp.pop %v975
  %v977 = vmul.f32 1.0, %v976
  %v978 = vmul.f32 %v970, %v807
  %v979 = vmul.f32 %v964, %v971
  %v980 = vadd.f32 %v978, %v979
  %v981 = vtanh.pop %v980
  %v982 = vmul.f32 %v977, %v981
  %983 = vst [vmem:[#allocation2] sm:$0xff] %v982
  %984 = vst [vmem:[#allocation3] sm:$0xff] %v980
  %s985 = scalar_lea.vmem %s2, 32
  %986 = vst [vmem:[%s985] sm:$0xff] %v982
  %v987 = vld [vmem:[#allocation2] sm:$0xff]
  %v988 = vld [vmem:[#allocation3] sm:$0xff]
  %s989 = scalar_lea.vmem %s0, 160
  %v990 = vld [vmem:[%s989] sm:$0xff]
  %v991 = vld [vmem:[%s989 + $0x8] sm:$0xff]
  %v992 = vld [vmem:[%s989 + $0x10] sm:$0xff]
  %v993 = vld [vmem:[%s989 + $0x18] sm:$0xff]
  %994 = vmatprep.subr.mxu0 %v81
  %995 = vmatpush1.msra.mxu0 %v80
  %996 = vmatprep.subr.mxu0 %v77
  %997 = vmatpush1.msra.mxu0 %v76
  %998 = vmatprep.subr.mxu0 %v73
  %999 = vmatpush1.msra.mxu0 %v72
  %1000 = vmatprep.subr.mxu0 %v69
  %1001 = vmatpush1.msra.mxu0 %v68
  %1002 = vmatprep.subr.mxu0 %v65
  %1003 = vmatpush1.msra.mxu0 %v64
  %1004 = vmatprep.subr.mxu0 %v61
  %1005 = vmatpush1.msra.mxu0 %v60
  %1006 = vmatprep.subr.mxu0 %v57
  %1007 = vmatpush1.msra.mxu0 %v56
  %1008 = vmatprep.subr.mxu0 %v53
  %1009 = vmatpush1.msra.mxu0 %v52
  %1010 = vmatprep.subr.mxu0 %v49
  %1011 = vmatpush1.msra.mxu0 %v48
  %1012 = vmatprep.subr.mxu0 %v45
  %1013 = vmatpush1.msra.mxu0 %v44
  %1014 = vmatprep.subr.mxu0 %v41
  %1015 = vmatpush1.msra.mxu0 %v40
  %1016 = vmatprep.subr.mxu0 %v37
  %1017 = vmatpush1.msra.mxu0 %v36
  %1018 = vmatprep.subr.mxu0 %v33
  %1019 = vmatpush1.msra.mxu0 %v32
  %1020 = vmatprep.subr.mxu0 %v29
  %1021 = vmatpush1.msra.mxu0 %v28
  %1022 = vmatprep.subr.mxu0 %v25
  %1023 = vmatpush1.msra.mxu0 %v24
  %1024 = vmatprep.subr.mxu0 %v21
  %1025 = vmatpush1.msra.mxu0 %v20
  %1026 = vmatprep.subr.mxu0 0.0
  %1027 = vmatpush2.msra.mxu0 0.0
  %1028 = vmatprep.subr.mxu0 0.0
  %1029 = vmatpush2.msra.mxu0 0.0
  %1030 = vmatprep.subr.mxu0 0.0
  %1031 = vmatpush2.msra.mxu0 0.0
  %1032 = vmatprep.subr.mxu0 0.0
  %1033 = vmatpush2.msra.mxu0 0.0
  %1034 = vmatprep.subr.mxu0 0.0
  %1035 = vmatpush2.msra.mxu0 0.0
  %1036 = vmatprep.subr.mxu0 0.0
  %1037 = vmatpush2.msra.mxu0 0.0
  %1038 = vmatprep.subr.mxu0 0.0
  %1039 = vmatpush2.msra.mxu0 0.0
  %1040 = vmatprep.subr.mxu0 0.0
  %1041 = vmatpush2.msra.mxu0 0.0
  %1042 = vmatprep.subr.mxu0 0.0
  %1043 = vmatpush2.msra.mxu0 0.0
  %1044 = vmatprep.subr.mxu0 0.0
  %1045 = vmatpush2.msra.mxu0 0.0
  %1046 = vmatprep.subr.mxu0 0.0
  %1047 = vmatpush2.msra.mxu0 0.0
  %1048 = vmatprep.subr.mxu0 0.0
  %1049 = vmatpush2.msra.mxu0 0.0
  %1050 = vmatprep.subr.mxu0 0.0
  %1051 = vmatpush2.msra.mxu0 0.0
  %1052 = vmatprep.subr.mxu0 0.0
  %1053 = vmatpush2.msra.mxu0 0.0
  %1054 = vmatprep.subr.mxu0 0.0
  %1055 = vmatpush2.msra.mxu0 0.0
  %1056 = vmatprep.subr.mxu0 0.0
  %1057 = vmatpush2.msra.mxu0 0.0
  %1058 = vmatprep.mubr.f32.mxu0 0.0
  %1059 = vmatmul.mubr.f32.gmra.mxu0 %v987
  %v1060 = vpop.f32.mrf.mxu0
  %v1061 = vadd.f32 0.0, %v1060
  %v1062 = vpop.f32.mrf.mxu0
  %v1063 = vadd.f32 0.0, %v1062
  %1064 = vdwg.mxu0
  %1065 = vmatprep.subr.mxu0 %v83
  %1066 = vmatpush1.msra.mxu0 %v82
  %1067 = vmatprep.subr.mxu0 %v79
  %1068 = vmatpush1.msra.mxu0 %v78
  %1069 = vmatprep.subr.mxu0 %v75
  %1070 = vmatpush1.msra.mxu0 %v74
  %1071 = vmatprep.subr.mxu0 %v71
  %1072 = vmatpush1.msra.mxu0 %v70
  %1073 = vmatprep.subr.mxu0 %v67
  %1074 = vmatpush1.msra.mxu0 %v66
  %1075 = vmatprep.subr.mxu0 %v63
  %1076 = vmatpush1.msra.mxu0 %v62
  %1077 = vmatprep.subr.mxu0 %v59
  %1078 = vmatpush1.msra.mxu0 %v58
  %1079 = vmatprep.subr.mxu0 %v55
  %1080 = vmatpush1.msra.mxu0 %v54
  %1081 = vmatprep.subr.mxu0 %v51
  %1082 = vmatpush1.msra.mxu0 %v50
  %1083 = vmatprep.subr.mxu0 %v47
  %1084 = vmatpush1.msra.mxu0 %v46
  %1085 = vmatprep.subr.mxu0 %v43
  %1086 = vmatpush1.msra.mxu0 %v42
  %1087 = vmatprep.subr.mxu0 %v39
  %1088 = vmatpush1.msra.mxu0 %v38
  %1089 = vmatprep.subr.mxu0 %v35
  %1090 = vmatpush1.msra.mxu0 %v34
  %1091 = vmatprep.subr.mxu0 %v31
  %1092 = vmatpush1.msra.mxu0 %v30
  %1093 = vmatprep.subr.mxu0 %v27
  %1094 = vmatpush1.msra.mxu0 %v26
  %1095 = vmatprep.subr.mxu0 %v23
  %1096 = vmatpush1.msra.mxu0 %v22
  %1097 = vmatprep.subr.mxu0 0.0
  %1098 = vmatpush2.msra.mxu0 0.0
  %1099 = vmatprep.subr.mxu0 0.0
  %1100 = vmatpush2.msra.mxu0 0.0
  %1101 = vmatprep.subr.mxu0 0.0
  %1102 = vmatpush2.msra.mxu0 0.0
  %1103 = vmatprep.subr.mxu0 0.0
  %1104 = vmatpush2.msra.mxu0 0.0
  %1105 = vmatprep.subr.mxu0 0.0
  %1106 = vmatpush2.msra.mxu0 0.0
  %1107 = vmatprep.subr.mxu0 0.0
  %1108 = vmatpush2.msra.mxu0 0.0
  %1109 = vmatprep.subr.mxu0 0.0
  %1110 = vmatpush2.msra.mxu0 0.0
  %1111 = vmatprep.subr.mxu0 0.0
  %1112 = vmatpush2.msra.mxu0 0.0
  %1113 = vmatprep.subr.mxu0 0.0
  %1114 = vmatpush2.msra.mxu0 0.0
  %1115 = vmatprep.subr.mxu0 0.0
  %1116 = vmatpush2.msra.mxu0 0.0
  %1117 = vmatprep.subr.mxu0 0.0
  %1118 = vmatpush2.msra.mxu0 0.0
  %1119 = vmatprep.subr.mxu0 0.0
  %1120 = vmatpush2.msra.mxu0 0.0
  %1121 = vmatprep.subr.mxu0 0.0
  %1122 = vmatpush2.msra.mxu0 0.0
  %1123 = vmatprep.subr.mxu0 0.0
  %1124 = vmatpush2.msra.mxu0 0.0
  %1125 = vmatprep.subr.mxu0 0.0
  %1126 = vmatpush2.msra.mxu0 0.0
  %1127 = vmatprep.subr.mxu0 0.0
  %1128 = vmatpush2.msra.mxu0 0.0
  %1129 = vmatprep.mubr.f32.mxu0 0.0
  %1130 = vmatmul.mubr.f32.gmra.mxu0 %v987
  %v1131 = vpop.f32.mrf.mxu0
  %v1132 = vadd.f32 0.0, %v1131
  %v1133 = vpop.f32.mrf.mxu0
  %v1134 = vadd.f32 0.0, %v1133
  %1135 = vdwg.mxu0
  %v1136 = vadd.f32 %v990, %v1061
  %v1137 = vadd.f32 %v991, %v1063
  %v1138 = vadd.f32 %v992, %v1132
  %v1139 = vadd.f32 %v993, %v1134
  %v1140 = vxor.u32 %v1136, 2147483648
  %v1141 = vmul.f32 %v1140, 1.442695
  %v1142 = vpow.pop %v1141
  %v1143 = vadd.f32 %v1142, 1.0
  %v1144 = vrcp.pop %v1143
  %v1145 = vmul.f32 1.0, %v1144
  %v1146 = vxor.u32 %v1137, 2147483648
  %v1147 = vmul.f32 %v1146, 1.442695
  %v1148 = vpow.pop %v1147
  %v1149 = vadd.f32 %v1148, 1.0
  %v1150 = vrcp.pop %v1149
  %v1151 = vmul.f32 1.0, %v1150
  %v1152 = vtanh.pop %v1138
  %v1153 = vxor.u32 %v1139, 2147483648
  %v1154 = vmul.f32 %v1153, 1.442695
  %v1155 = vpow.pop %v1154
  %v1156 = vadd.f32 %v1155, 1.0
  %v1157 = vrcp.pop %v1156
  %v1158 = vmul.f32 1.0, %v1157
  %v1159 = vmul.f32 %v1151, %v988
  %v1160 = vmul.f32 %v1145, %v1152
  %v1161 = vadd.f32 %v1159, %v1160
  %v1162 = vtanh.pop %v1161
  %v1163 = vmul.f32 %v1158, %v1162
  %1164 = vst [vmem:[#allocation2] sm:$0xff] %v1163
  %1165 = vst [vmem:[#allocation3] sm:$0xff] %v1161
  %s1166 = scalar_lea.vmem %s2, 40
  %1167 = vst [vmem:[%s1166] sm:$0xff] %v1163
  %v1168 = vld [vmem:[#allocation2] sm:$0xff]
  %v1169 = vld [vmem:[#allocation3] sm:$0xff]
  %s1170 = scalar_lea.vmem %s0, 192
  %v1171 = vld [vmem:[%s1170] sm:$0xff]
  %v1172 = vld [vmem:[%s1170 + $0x8] sm:$0xff]
  %v1173 = vld [vmem:[%s1170 + $0x10] sm:$0xff]
  %v1174 = vld [vmem:[%s1170 + $0x18] sm:$0xff]
  %1175 = vmatprep.subr.mxu0 %v81
  %1176 = vmatpush1.msra.mxu0 %v80
  %1177 = vmatprep.subr.mxu0 %v77
  %1178 = vmatpush1.msra.mxu0 %v76
  %1179 = vmatprep.subr.mxu0 %v73
  %1180 = vmatpush1.msra.mxu0 %v72
  %1181 = vmatprep.subr.mxu0 %v69
  %1182 = vmatpush1.msra.mxu0 %v68
  %1183 = vmatprep.subr.mxu0 %v65
  %1184 = vmatpush1.msra.mxu0 %v64
  %1185 = vmatprep.subr.mxu0 %v61
  %1186 = vmatpush1.msra.mxu0 %v60
  %1187 = vmatprep.subr.mxu0 %v57
  %1188 = vmatpush1.msra.mxu0 %v56
  %1189 = vmatprep.subr.mxu0 %v53
  %1190 = vmatpush1.msra.mxu0 %v52
  %1191 = vmatprep.subr.mxu0 %v49
  %1192 = vmatpush1.msra.mxu0 %v48
  %1193 = vmatprep.subr.mxu0 %v45
  %1194 = vmatpush1.msra.mxu0 %v44
  %1195 = vmatprep.subr.mxu0 %v41
  %1196 = vmatpush1.msra.mxu0 %v40
  %1197 = vmatprep.subr.mxu0 %v37
  %1198 = vmatpush1.msra.mxu0 %v36
  %1199 = vmatprep.subr.mxu0 %v33
  %1200 = vmatpush1.msra.mxu0 %v32
  %1201 = vmatprep.subr.mxu0 %v29
  %1202 = vmatpush1.msra.mxu0 %v28
  %1203 = vmatprep.subr.mxu0 %v25
  %1204 = vmatpush1.msra.mxu0 %v24
  %1205 = vmatprep.subr.mxu0 %v21
  %1206 = vmatpush1.msra.mxu0 %v20
  %1207 = vmatprep.subr.mxu0 0.0
  %1208 = vmatpush2.msra.mxu0 0.0
  %1209 = vmatprep.subr.mxu0 0.0
  %1210 = vmatpush2.msra.mxu0 0.0
  %1211 = vmatprep.subr.mxu0 0.0
  %1212 = vmatpush2.msra.mxu0 0.0
  %1213 = vmatprep.subr.mxu0 0.0
  %1214 = vmatpush2.msra.mxu0 0.0
  %1215 = vmatprep.subr.mxu0 0.0
  %1216 = vmatpush2.msra.mxu0 0.0
  %1217 = vmatprep.subr.mxu0 0.0
  %1218 = vmatpush2.msra.mxu0 0.0
  %1219 = vmatprep.subr.mxu0 0.0
  %1220 = vmatpush2.msra.mxu0 0.0
  %1221 = vmatprep.subr.mxu0 0.0
  %1222 = vmatpush2.msra.mxu0 0.0
  %1223 = vmatprep.subr.mxu0 0.0
  %1224 = vmatpush2.msra.mxu0 0.0
  %1225 = vmatprep.subr.mxu0 0.0
  %1226 = vmatpush2.msra.mxu0 0.0
  %1227 = vmatprep.subr.mxu0 0.0
  %1228 = vmatpush2.msra.mxu0 0.0
  %1229 = vmatprep.subr.mxu0 0.0
  %1230 = vmatpush2.msra.mxu0 0.0
  %1231 = vmatprep.subr.mxu0 0.0
  %1232 = vmatpush2.msra.mxu0 0.0
  %1233 = vmatprep.subr.mxu0 0.0
  %1234 = vmatpush2.msra.mxu0 0.0
  %1235 = vmatprep.subr.mxu0 0.0
  %1236 = vmatpush2.msra.mxu0 0.0
  %1237 = vmatprep.subr.mxu0 0.0
  %1238 = vmatpush2.msra.mxu0 0.0
  %1239 = vmatprep.mubr.f32.mxu0 0.0
  %1240 = vmatmul.mubr.f32.gmra.mxu0 %v1168
  %v1241 = vpop.f32.mrf.mxu0
  %v1242 = vadd.f32 0.0, %v1241
  %v1243 = vpop.f32.mrf.mxu0
  %v1244 = vadd.f32 0.0, %v1243
  %1245 = vdwg.mxu0
  %1246 = vmatprep.subr.mxu0 %v83
  %1247 = vmatpush1.msra.mxu0 %v82
  %1248 = vmatprep.subr.mxu0 %v79
  %1249 = vmatpush1.msra.mxu0 %v78
  %1250 = vmatprep.subr.mxu0 %v75
  %1251 = vmatpush1.msra.mxu0 %v74
  %1252 = vmatprep.subr.mxu0 %v71
  %1253 = vmatpush1.msra.mxu0 %v70
  %1254 = vmatprep.subr.mxu0 %v67
  %1255 = vmatpush1.msra.mxu0 %v66
  %1256 = vmatprep.subr.mxu0 %v63
  %1257 = vmatpush1.msra.mxu0 %v62
  %1258 = vmatprep.subr.mxu0 %v59
  %1259 = vmatpush1.msra.mxu0 %v58
  %1260 = vmatprep.subr.mxu0 %v55
  %1261 = vmatpush1.msra.mxu0 %v54
  %1262 = vmatprep.subr.mxu0 %v51
  %1263 = vmatpush1.msra.mxu0 %v50
  %1264 = vmatprep.subr.mxu0 %v47
  %1265 = vmatpush1.msra.mxu0 %v46
  %1266 = vmatprep.subr.mxu0 %v43
  %1267 = vmatpush1.msra.mxu0 %v42
  %1268 = vmatprep.subr.mxu0 %v39
  %1269 = vmatpush1.msra.mxu0 %v38
  %1270 = vmatprep.subr.mxu0 %v35
  %1271 = vmatpush1.msra.mxu0 %v34
  %1272 = vmatprep.subr.mxu0 %v31
  %1273 = vmatpush1.msra.mxu0 %v30
  %1274 = vmatprep.subr.mxu0 %v27
  %1275 = vmatpush1.msra.mxu0 %v26
  %1276 = vmatprep.subr.mxu0 %v23
  %1277 = vmatpush1.msra.mxu0 %v22
  %1278 = vmatprep.subr.mxu0 0.0
  %1279 = vmatpush2.msra.mxu0 0.0
  %1280 = vmatprep.subr.mxu0 0.0
  %1281 = vmatpush2.msra.mxu0 0.0
  %1282 = vmatprep.subr.mxu0 0.0
  %1283 = vmatpush2.msra.mxu0 0.0
  %1284 = vmatprep.subr.mxu0 0.0
  %1285 = vmatpush2.msra.mxu0 0.0
  %1286 = vmatprep.subr.mxu0 0.0
  %1287 = vmatpush2.msra.mxu0 0.0
  %1288 = vmatprep.subr.mxu0 0.0
  %1289 = vmatpush2.msra.mxu0 0.0
  %1290 = vmatprep.subr.mxu0 0.0
  %1291 = vmatpush2.msra.mxu0 0.0
  %1292 = vmatprep.subr.mxu0 0.0
  %1293 = vmatpush2.msra.mxu0 0.0
  %1294 = vmatprep.subr.mxu0 0.0
  %1295 = vmatpush2.msra.mxu0 0.0
  %1296 = vmatprep.subr.mxu0 0.0
  %1297 = vmatpush2.msra.mxu0 0.0
  %1298 = vmatprep.subr.mxu0 0.0
  %1299 = vmatpush2.msra.mxu0 0.0
  %1300 = vmatprep.subr.mxu0 0.0
  %1301 = vmatpush2.msra.mxu0 0.0
  %1302 = vmatprep.subr.mxu0 0.0
  %1303 = vmatpush2.msra.mxu0 0.0
  %1304 = vmatprep.subr.mxu0 0.0
  %1305 = vmatpush2.msra.mxu0 0.0
  %1306 = vmatprep.subr.mxu0 0.0
  %1307 = vmatpush2.msra.mxu0 0.0
  %1308 = vmatprep.subr.mxu0 0.0
  %1309 = vmatpush2.msra.mxu0 0.0
  %1310 = vmatprep.mubr.f32.mxu0 0.0
  %1311 = vmatmul.mubr.f32.gmra.mxu0 %v1168
  %v1312 = vpop.f32.mrf.mxu0
  %v1313 = vadd.f32 0.0, %v1312
  %v1314 = vpop.f32.mrf.mxu0
  %v1315 = vadd.f32 0.0, %v1314
  %1316 = vdwg.mxu0
  %v1317 = vadd.f32 %v1171, %v1242
  %v1318 = vadd.f32 %v1172, %v1244
  %v1319 = vadd.f32 %v1173, %v1313
  %v1320 = vadd.f32 %v1174, %v1315
  %v1321 = vxor.u32 %v1317, 2147483648
  %v1322 = vmul.f32 %v1321, 1.442695
  %v1323 = vpow.pop %v1322
  %v1324 = vadd.f32 %v1323, 1.0
  %v1325 = vrcp.pop %v1324
  %v1326 = vmul.f32 1.0, %v1325
  %v1327 = vxor.u32 %v1318, 2147483648
  %v1328 = vmul.f32 %v1327, 1.442695
  %v1329 = vpow.pop %v1328
  %v1330 = vadd.f32 %v1329, 1.0
  %v1331 = vrcp.pop %v1330
  %v1332 = vmul.f32 1.0, %v1331
  %v1333 = vtanh.pop %v1319
  %v1334 = vxor.u32 %v1320, 2147483648
  %v1335 = vmul.f32 %v1334, 1.442695
  %v1336 = vpow.pop %v1335
  %v1337 = vadd.f32 %v1336, 1.0
  %v1338 = vrcp.pop %v1337
  %v1339 = vmul.f32 1.0, %v1338
  %v1340 = vmul.f32 %v1332, %v1169
  %v1341 = vmul.f32 %v1326, %v1333
  %v1342 = vadd.f32 %v1340, %v1341
  %v1343 = vtanh.pop %v1342
  %v1344 = vmul.f32 %v1339, %v1343
  %1345 = vst [vmem:[#allocation2] sm:$0xff] %v1344
  %1346 = vst [vmem:[#allocation3] sm:$0xff] %v1342
  %s1347 = scalar_lea.vmem %s2, 48
  %1348 = vst [vmem:[%s1347] sm:$0xff] %v1344
  %v1349 = vld [vmem:[#allocation2] sm:$0xff]
  %v1350 = vld [vmem:[#allocation3] sm:$0xff]
  %s1351 = scalar_lea.vmem %s0, 224
  %v1352 = vld [vmem:[%s1351] sm:$0xff]
  %v1353 = vld [vmem:[%s1351 + $0x8] sm:$0xff]
  %v1354 = vld [vmem:[%s1351 + $0x10] sm:$0xff]
  %v1355 = vld [vmem:[%s1351 + $0x18] sm:$0xff]
  %1356 = vmatprep.subr.mxu0 %v81
  %1357 = vmatpush1.msra.mxu0 %v80
  %1358 = vmatprep.subr.mxu0 %v77
  %1359 = vmatpush1.msra.mxu0 %v76
  %1360 = vmatprep.subr.mxu0 %v73
  %1361 = vmatpush1.msra.mxu0 %v72
  %1362 = vmatprep.subr.mxu0 %v69
  %1363 = vmatpush1.msra.mxu0 %v68
  %1364 = vmatprep.subr.mxu0 %v65
  %1365 = vmatpush1.msra.mxu0 %v64
  %1366 = vmatprep.subr.mxu0 %v61
  %1367 = vmatpush1.msra.mxu0 %v60
  %1368 = vmatprep.subr.mxu0 %v57
  %1369 = vmatpush1.msra.mxu0 %v56
  %1370 = vmatprep.subr.mxu0 %v53
  %1371 = vmatpush1.msra.mxu0 %v52
  %1372 = vmatprep.subr.mxu0 %v49
  %1373 = vmatpush1.msra.mxu0 %v48
  %1374 = vmatprep.subr.mxu0 %v45
  %1375 = vmatpush1.msra.mxu0 %v44
  %1376 = vmatprep.subr.mxu0 %v41
  %1377 = vmatpush1.msra.mxu0 %v40
  %1378 = vmatprep.subr.mxu0 %v37
  %1379 = vmatpush1.msra.mxu0 %v36
  %1380 = vmatprep.subr.mxu0 %v33
  %1381 = vmatpush1.msra.mxu0 %v32
  %1382 = vmatprep.subr.mxu0 %v29
  %1383 = vmatpush1.msra.mxu0 %v28
  %1384 = vmatprep.subr.mxu0 %v25
  %1385 = vmatpush1.msra.mxu0 %v24
  %1386 = vmatprep.subr.mxu0 %v21
  %1387 = vmatpush1.msra.mxu0 %v20
  %1388 = vmatprep.subr.mxu0 0.0
  %1389 = vmatpush2.msra.mxu0 0.0
  %1390 = vmatprep.subr.mxu0 0.0
  %1391 = vmatpush2.msra.mxu0 0.0
  %1392 = vmatprep.subr.mxu0 0.0
  %1393 = vmatpush2.msra.mxu0 0.0
  %1394 = vmatprep.subr.mxu0 0.0
  %1395 = vmatpush2.msra.mxu0 0.0
  %1396 = vmatprep.subr.mxu0 0.0
  %1397 = vmatpush2.msra.mxu0 0.0
  %1398 = vmatprep.subr.mxu0 0.0
  %1399 = vmatpush2.msra.mxu0 0.0
  %1400 = vmatprep.subr.mxu0 0.0
  %1401 = vmatpush2.msra.mxu0 0.0
  %1402 = vmatprep.subr.mxu0 0.0
  %1403 = vmatpush2.msra.mxu0 0.0
  %1404 = vmatprep.subr.mxu0 0.0
  %1405 = vmatpush2.msra.mxu0 0.0
  %1406 = vmatprep.subr.mxu0 0.0
  %1407 = vmatpush2.msra.mxu0 0.0
  %1408 = vmatprep.subr.mxu0 0.0
  %1409 = vmatpush2.msra.mxu0 0.0
  %1410 = vmatprep.subr.mxu0 0.0
  %1411 = vmatpush2.msra.mxu0 0.0
  %1412 = vmatprep.subr.mxu0 0.0
  %1413 = vmatpush2.msra.mxu0 0.0
  %1414 = vmatprep.subr.mxu0 0.0
  %1415 = vmatpush2.msra.mxu0 0.0
  %1416 = vmatprep.subr.mxu0 0.0
  %1417 = vmatpush2.msra.mxu0 0.0
  %1418 = vmatprep.subr.mxu0 0.0
  %1419 = vmatpush2.msra.mxu0 0.0
  %1420 = vmatprep.mubr.f32.mxu0 0.0
  %1421 = vmatmul.mubr.f32.gmra.mxu0 %v1349
  %v1422 = vpop.f32.mrf.mxu0
  %v1423 = vadd.f32 0.0, %v1422
  %v1424 = vpop.f32.mrf.mxu0
  %v1425 = vadd.f32 0.0, %v1424
  %1426 = vdwg.mxu0
  %1427 = vmatprep.subr.mxu0 %v83
  %1428 = vmatpush1.msra.mxu0 %v82
  %1429 = vmatprep.subr.mxu0 %v79
  %1430 = vmatpush1.msra.mxu0 %v78
  %1431 = vmatprep.subr.mxu0 %v75
  %1432 = vmatpush1.msra.mxu0 %v74
  %1433 = vmatprep.subr.mxu0 %v71
  %1434 = vmatpush1.msra.mxu0 %v70
  %1435 = vmatprep.subr.mxu0 %v67
  %1436 = vmatpush1.msra.mxu0 %v66
  %1437 = vmatprep.subr.mxu0 %v63
  %1438 = vmatpush1.msra.mxu0 %v62
  %1439 = vmatprep.subr.mxu0 %v59
  %1440 = vmatpush1.msra.mxu0 %v58
  %1441 = vmatprep.subr.mxu0 %v55
  %1442 = vmatpush1.msra.mxu0 %v54
  %1443 = vmatprep.subr.mxu0 %v51
  %1444 = vmatpush1.msra.mxu0 %v50
  %1445 = vmatprep.subr.mxu0 %v47
  %1446 = vmatpush1.msra.mxu0 %v46
  %1447 = vmatprep.subr.mxu0 %v43
  %1448 = vmatpush1.msra.mxu0 %v42
  %1449 = vmatprep.subr.mxu0 %v39
  %1450 = vmatpush1.msra.mxu0 %v38
  %1451 = vmatprep.subr.mxu0 %v35
  %1452 = vmatpush1.msra.mxu0 %v34
  %1453 = vmatprep.subr.mxu0 %v31
  %1454 = vmatpush1.msra.mxu0 %v30
  %1455 = vmatprep.subr.mxu0 %v27
  %1456 = vmatpush1.msra.mxu0 %v26
  %1457 = vmatprep.subr.mxu0 %v23
  %1458 = vmatpush1.msra.mxu0 %v22
  %1459 = vmatprep.subr.mxu0 0.0
  %1460 = vmatpush2.msra.mxu0 0.0
  %1461 = vmatprep.subr.mxu0 0.0
  %1462 = vmatpush2.msra.mxu0 0.0
  %1463 = vmatprep.subr.mxu0 0.0
  %1464 = vmatpush2.msra.mxu0 0.0
  %1465 = vmatprep.subr.mxu0 0.0
  %1466 = vmatpush2.msra.mxu0 0.0
  %1467 = vmatprep.subr.mxu0 0.0
  %1468 = vmatpush2.msra.mxu0 0.0
  %1469 = vmatprep.subr.mxu0 0.0
  %1470 = vmatpush2.msra.mxu0 0.0
  %1471 = vmatprep.subr.mxu0 0.0
  %1472 = vmatpush2.msra.mxu0 0.0
  %1473 = vmatprep.subr.mxu0 0.0
  %1474 = vmatpush2.msra.mxu0 0.0
  %1475 = vmatprep.subr.mxu0 0.0
  %1476 = vmatpush2.msra.mxu0 0.0
  %1477 = vmatprep.subr.mxu0 0.0
  %1478 = vmatpush2.msra.mxu0 0.0
  %1479 = vmatprep.subr.mxu0 0.0
  %1480 = vmatpush2.msra.mxu0 0.0
  %1481 = vmatprep.subr.mxu0 0.0
  %1482 = vmatpush2.msra.mxu0 0.0
  %1483 = vmatprep.subr.mxu0 0.0
  %1484 = vmatpush2.msra.mxu0 0.0
  %1485 = vmatprep.subr.mxu0 0.0
  %1486 = vmatpush2.msra.mxu0 0.0
  %1487 = vmatprep.subr.mxu0 0.0
  %1488 = vmatpush2.msra.mxu0 0.0
  %1489 = vmatprep.subr.mxu0 0.0
  %1490 = vmatpush2.msra.mxu0 0.0
  %1491 = vmatprep.mubr.f32.mxu0 0.0
  %1492 = vmatmul.mubr.f32.gmra.mxu0 %v1349
  %v1493 = vpop.f32.mrf.mxu0
  %v1494 = vadd.f32 0.0, %v1493
  %v1495 = vpop.f32.mrf.mxu0
  %v1496 = vadd.f32 0.0, %v1495
  %1497 = vdwg.mxu0
  %v1498 = vadd.f32 %v1352, %v1423
  %v1499 = vadd.f32 %v1353, %v1425
  %v1500 = vadd.f32 %v1354, %v1494
  %v1501 = vadd.f32 %v1355, %v1496
  %v1502 = vxor.u32 %v1498, 2147483648
  %v1503 = vmul.f32 %v1502, 1.442695
  %v1504 = vpow.pop %v1503
  %v1505 = vadd.f32 %v1504, 1.0
  %v1506 = vrcp.pop %v1505
  %v1507 = vmul.f32 1.0, %v1506
  %v1508 = vxor.u32 %v1499, 2147483648
  %v1509 = vmul.f32 %v1508, 1.442695
  %v1510 = vpow.pop %v1509
  %v1511 = vadd.f32 %v1510, 1.0
  %v1512 = vrcp.pop %v1511
  %v1513 = vmul.f32 1.0, %v1512
  %v1514 = vtanh.pop %v1500
  %v1515 = vxor.u32 %v1501, 2147483648
  %v1516 = vmul.f32 %v1515, 1.442695
  %v1517 = vpow.pop %v1516
  %v1518 = vadd.f32 %v1517, 1.0
  %v1519 = vrcp.pop %v1518
  %v1520 = vmul.f32 1.0, %v1519
  %v1521 = vmul.f32 %v1513, %v1350
  %v1522 = vmul.f32 %v1507, %v1514
  %v1523 = vadd.f32 %v1521, %v1522
  %v1524 = vtanh.pop %v1523
  %v1525 = vmul.f32 %v1520, %v1524
  %1526 = vst [vmem:[#allocation2] sm:$0xff] %v1525
  %1527 = vst [vmem:[#allocation3] sm:$0xff] %v1523
  %s1528 = scalar_lea.vmem %s2, 56
  %1529 = vst [vmem:[%s1528] sm:$0xff] %v1525
  // Predicated region
  $region14: #{seq_encoder2_forward.1} parent=0 // pred_check
    %p1530 = pneg %p14
  $region15: #{seq_encoder2_forward.1} parent=0 // pred_check_branch
    %1532 = sbr.rel (%p1530) target = $region17
  $region16: #{seq_encoder2_forward.1} parent=0 // pred_region
    %v1533 = vld [vmem:[#allocation2] sm:$0xff]
    %1534 = vst [vmem:[%s3] sm:$0xff] %v1533
    %v1535 = vld [vmem:[#allocation3] sm:$0xff]
    %1536 = vst [vmem:[%s4] sm:$0xff] %v1535
  $region17: #{seq_encoder2_forward.1} parent=0 // pred_fallthru
    _
  // Predicated region
  $region18: #{seq_encoder2_forward.1} parent=0 // pred_check
    _
  $region19: #{seq_encoder2_forward.1} parent=0 // pred_check_branch
    %1538 = sbr.rel (0) target = $region21
  $region20: #{seq_encoder2_forward.1} parent=0 // pred_region
    _
  $region21: #{seq_encoder2_forward.1} parent=0 // pred_fallthru
    _
  // Predicated region
  $region22: #{seq_encoder2_forward.1} parent=0 // pred_check
    _
  $region23: #{seq_encoder2_forward.1} parent=0 // pred_check_branch
    %1540 = sbr.rel (0) target = $region25
  $region24: #{seq_encoder2_forward.1} parent=0 // pred_region
    _
  $region25: #{seq_encoder2_forward.1} parent=0 // pred_fallthru
    _
  // Predicated region
  $region26: #{seq_encoder2_forward.1} parent=0 // pred_check
    _
  $region27: #{seq_encoder2_forward.1} parent=0 // pred_check_branch
    %1542 = sbr.rel (0) target = $region29
  $region28: #{seq_encoder2_forward.1} parent=0 // pred_region
    _
  $region29: #{seq_encoder2_forward.1} parent=0 // pred_fallthru
    _
  // Predicated region
  $region30: #{seq_encoder2_forward.1} parent=0 // pred_check
    _
  $region31: #{seq_encoder2_forward.1} parent=0 // pred_check_branch
    %1544 = sbr.rel (0) target = $region33
  $region32: #{seq_encoder2_forward.1} parent=0 // pred_region
    _
  $region33: #{seq_encoder2_forward.1} parent=0 // pred_fallthru
    _
  // Predicated region
  $region34: #{seq_encoder2_forward.1} parent=0 // pred_check
    _
  $region35: #{seq_encoder2_forward.1} parent=0 // pred_check_branch
    %1546 = sbr.rel (0) target = $region37
  $region36: #{seq_encoder2_forward.1} parent=0 // pred_region
    _
  $region37: #{seq_encoder2_forward.1} parent=0 // pred_fallthru
    _
  // Predicated region
  $region38: #{seq_encoder2_forward.1} parent=0 // pred_check
    _
  $region39: #{seq_encoder2_forward.1} parent=0 // pred_check_branch
    %1548 = sbr.rel (0) target = $region41
  $region40: #{seq_encoder2_forward.1} parent=0 // pred_region
    _
  $region41: #{seq_encoder2_forward.1} parent=0 // pred_fallthru
    _

</llo_original>
